<compile_context>
chip_gen: v7x
topology: tpu7x:2x2x1
jax: 0.10.0
libtpu: 0.0.40
codegen_flags: <defaults>
</compile_context>

<pallas_src>
import math

import jax
import jax.numpy as jnp
from jax.experimental import pallas as pl
from jax.experimental.pallas import tpu as pltpu

MASK_VALUE = -10000000000.0


def _round_up(x, m):
    return ((x + m - 1) // m) * m


def _vmem_limit_bytes():
    """Per-generation scoped-VMEM limit: ~3/4 of physical VMEM, capped at 96 MiB.
    v5e/v6e (128 MiB physical) -> 96 MiB; v7x (64 MiB physical) -> 48 MiB."""
    cap = 64 * 1024 * 1024                      # conservative fallback (smallest = v7x)
    try:
        info = pltpu.get_tpu_info()
        cap = int(getattr(info, "vmem_capacity_bytes", cap) or cap)
    except Exception:
        pass
    return min((cap * 3) // 4, 96 * 1024 * 1024)


def _pick_batch_tile(batch, l, e, lin, enc_itemsize, out_itemsize, weight_bytes, vmem_limit):
    """Largest sublane-aligned batch tile whose working set (with honest accounting of the
    double-buffered blocks and f32 temporaries) fits the VMEM limit, capped so the grid
    has >= 2 tiles whenever the batch allows it (keeps both v7x TensorCores busy)."""
    per_row = 2 * l * e * enc_itemsize          # encoder block (double-buffered by pipeline)
    per_row += 2 * max(e, lin, 1) * 4           # hoisted qk / dh_part block (double-buffered)
    per_row += 2 * l * 4                        # mask-bias block (double-buffered)
    per_row += 2 * e * out_itemsize             # output block (double-buffered)
    per_row += (2 * l + 2 * e + 8) * 4          # energy / p / ctx / denom f32 temporaries
    if lin:
        per_row += 3 * l * lin * 4              # enc_part, h, h*w2 f32 temporaries (additive)
    budget = max(vmem_limit - 2 * weight_bytes - (4 << 20), 0)   # weights (2 bufs) + slack
    tb = max(8, (budget // per_row) // 8 * 8)
    tb = min(tb, _round_up(batch, 8))
    if batch > 8:                               # >= 2 grid tiles for megacore sharding
        tb = min(tb, max(8, _round_up(pl.cdiv(batch, 2), 8)))
    return tb


def _softmax_context_store(energy, enc, out_ref):
    """energy: (TB, 1, L) f32 with the additive mask bias already folded in.
    enc: (TB, L, E) native dtype.  Writes a dense (TB, E) block."""
    m = jnp.max(energy, axis=-1, keepdims=True)
    p = jnp.exp(energy - m)
    denom = jnp.sum(p, axis=-1, keepdims=True)                      # (TB, 1, 1)
    # Context on the MXU (batched contraction over L); no (TB, L, E) f32 temporary.
    ctx = jnp.einsum('bql,ble->bqe', p.astype(enc.dtype), enc,
                     preferred_element_type=jnp.float32)            # (TB, 1, E)
    # Normalize after the matmul; exact reciprocal keeps the 1e-4 tolerance comfortably.
    out = ctx * pl.reciprocal(denom, approx=False)
    out_ref[...] = out[:, 0, :].astype(out_ref.dtype)               # dense 2-D store


def dot_product_attention_kernel(enc_ref, qk_ref, bias_ref, out_ref):
    enc = enc_ref[...]                                              # (TB, L, E) native dtype
    qk = qk_ref[...]                                                # (TB, E) f32, pre-scaled
    # energy[b, l] = enc[b, l, :] . qk[b, :]   (batched MXU contraction, q == 1)
    energy = jnp.einsum('bqe,ble->bql', qk[:, None, :].astype(enc.dtype), enc,
                        preferred_element_type=jnp.float32)         # (TB, 1, L)
    # bias carries MASK_VALUE for padded positions plus the hoisted (q . bk)/sqrt(E) term.
    _softmax_context_store(energy + bias_ref[...], enc, out_ref)


def additive_attention_kernel(enc_ref, dhp_ref, bias_ref, w1e_t_ref, w2_ref, out_ref):
    enc = enc_ref[...]                                              # (TB, L, E) native dtype
    tb, l, e = enc.shape
    lin = w1e_t_ref.shape[-1]
    # lin1(cat(enc, dh)): the dh half is hoisted (dhp); only the enc half runs per tile.
    enc_part = jnp.dot(enc.reshape(tb * l, e), w1e_t_ref[...].astype(enc.dtype),
                       preferred_element_type=jnp.float32).reshape(tb, l, lin)
    h = jnp.maximum(enc_part + dhp_ref[...][:, None, :], 0.0)       # relu, (TB, L, lin) f32
    # lin2 on the VPU/XLU: multiply + lane reduce (MXU would have M=1 per batch row).
    energy = jnp.sum(h * w2_ref[...][None, :, :], axis=-1)          # (TB, L)
    # bias carries MASK_VALUE for padded positions plus the (softmax-invariant) b2 shift.
    _softmax_context_store(energy[:, None, :] + bias_ref[...], enc, out_ref)


def prepare_attention_params(params, attention, encoder_out_size):
    """One-time parameter prep (transposes / reshapes hoisted out of the per-call path)."""
    if attention == 'dot_product':
        return (
            jnp.asarray(params['wq'].T, jnp.float32),               # (D, E)
            jnp.asarray(params['bq'], jnp.float32),                 # (E,)
            jnp.asarray(params['wk'], jnp.float32),                 # (E, E)  used as q @ Wk
            jnp.asarray(params['bk'], jnp.float32),                 # (E,)
        )
    if attention == 'additive':
        w1 = params['w1']                                           # (lin, E + D)
        e = encoder_out_size
        return (
            jnp.asarray(w1[:, :e].T, jnp.float32),                  # (E, lin)
            jnp.asarray(w1[:, e:].T, jnp.float32),                  # (D, lin)
            jnp.asarray(params['b1'], jnp.float32),                 # (lin,)
            jnp.asarray(params['w2'], jnp.float32),                 # (1, lin)
            jnp.asarray(params['b2'], jnp.float32).reshape(()),     # scalar
        )
    if attention == 'none':
        return ()
    raise ValueError('Attention function not implemented')


def attention_layer_forward(prepared, attention, encoder_output, decoder_hidden, mask,
                            *, batch_tile=None):
    """Mirrors AttentionLayer.forward. Returns context of shape (B, 1, E)."""
    b, l, e = encoder_output.shape
    if attention == 'none':
        # ignore_attention branch: trivial slice, no Pallas hot path needed.
        return encoder_output[:, -1, :][:, None, :]
    if attention not in ('dot_product', 'additive'):
        raise ValueError('Attention function not implemented')

    dh = decoder_hidden.astype(jnp.float32)
    # Additive mask bias: 0 for real positions, MASK_VALUE for padded ones (== masked_fill
    # up to a value that underflows to exactly 0 after the softmax max-shift).
    mask_bias = jnp.where(mask, MASK_VALUE, 0.0).astype(jnp.float32)        # (B, L)

    if attention == 'dot_product':
        wq_t, bq, wk, bk = prepared
        inv_sqrt_e = 1.0 / math.sqrt(e)
        # Hoisted decoder-hidden-only projections (one well-shaped (B, .) matmul in XLA):
        #   <q, Wk enc_l + bk>/sqrt(E) = enc_l . (q@Wk)/sqrt(E) + (q.bk)/sqrt(E)
        q = dh @ wq_t + bq                                                  # (B, E)
        qk = (q @ wk) * inv_sqrt_e                                          # (B, E)
        qb = jnp.sum(q * bk, axis=-1, keepdims=True) * inv_sqrt_e           # (B, 1)
        bias = (mask_bias + qb)[:, None, :]                                 # (B, 1, L)
        row_inputs = (qk,)
        weights = ()
        lin = 0
        kernel = dot_product_attention_kernel
    else:
        w1e_t, w1d_t, b1, w2, b2 = prepared
        lin = w1e_t.shape[-1]
        dhp = dh @ w1d_t + b1                                               # (B, lin) hoisted
        # b2 shifts every energy uniformly; folding it into the bias keeps the unmasked
        # energies identical to the reference (softmax is shift-invariant regardless).
        bias = (mask_bias + b2)[:, None, :]                                 # (B, 1, L)
        row_inputs = (dhp,)
        weights = (w1e_t, w2)
        kernel = additive_attention_kernel

    vmem_limit = _vmem_limit_bytes()
    weight_bytes = sum(int(w.size) * w.dtype.itemsize for w in weights)
    if batch_tile is None:
        tb = _pick_batch_tile(b, l, e, lin, encoder_output.dtype.itemsize,
                              encoder_output.dtype.itemsize, weight_bytes, vmem_limit)
    else:
        tb = _round_up(max(int(batch_tile), 1), 8)

    in_specs = [
        # encoder streamed as-is: no wrapper-side pad copy; L block dim == full extent.
        pl.BlockSpec((tb, l, e), lambda i: (i, 0, 0)),
    ]
    in_specs += [pl.BlockSpec((tb,) + r.shape[1:],
                              lambda i, _n=r.ndim: (i,) + (0,) * (_n - 1))
                 for r in row_inputs]
    in_specs += [pl.BlockSpec((tb, 1, l), lambda i: (i, 0, 0))]             # mask bias
    in_specs += [pl.BlockSpec(w.shape, lambda i, _n=w.ndim: (0,) * _n)      # resident weights
                 for w in weights]

    out = pl.pallas_call(
        kernel,
        out_shape=jax.ShapeDtypeStruct((b, e), encoder_output.dtype),       # dense 2-D output
        grid=(pl.cdiv(b, tb),),                                             # batch remainder via masking
        in_specs=in_specs,
        out_specs=pl.BlockSpec((tb, e), lambda i: (i, 0)),
        compiler_params=pltpu.CompilerParams(
            dimension_semantics=("parallel",),         # shard batch tiles across TCs (v7x)
            vmem_limit_bytes=vmem_limit,
        ),
    )(encoder_output, *row_inputs, bias, *weights)
    return out[:, None, :]                                                  # (B, 1, E)


def _linear_init(key, out_features, in_features):
    """Deterministic nn.Linear-style init: U(-1/sqrt(fan_in), 1/sqrt(fan_in))."""
    kw, kb = jax.random.split(key)
    bound = 1.0 / math.sqrt(in_features)
    w = jax.random.uniform(kw, (out_features, in_features), jnp.float32, -bound, bound)
    bvec = jax.random.uniform(kb, (out_features,), jnp.float32, -bound, bound)
    return w, bvec


if __name__ == "__main__":
    # batch, max_src_length, encoder_out, decoder_hidden, lin_size
    B, L, E, D, LIN = 16, 12, 128, 64, 32

    key = jax.random.PRNGKey(0)
    keys = jax.random.split(key, 7)
    encoder_output = jax.random.normal(keys[0], (B, L, E), jnp.float32)
    decoder_hidden = jax.random.normal(keys[1], (B, D), jnp.float32)
    lengths = jax.random.randint(keys[6], (B,), 1, L + 1)
    mask = jnp.arange(L)[None, :] >= lengths[:, None]          # True == padded position

    wq, bq = _linear_init(keys[2], E, D)        # linQ: decoder_hidden_size -> encoder_out_size
    wk, bk = _linear_init(keys[3], E, E)        # linK: encoder_out_size -> encoder_out_size
    w1, b1 = _linear_init(keys[4], LIN, E + D)  # lin1: (encoder_out + decoder_hidden) -> lin_size
    w2, b2 = _linear_init(keys[5], 1, LIN)      # lin2: lin_size -> 1
    params = dict(wq=wq, bq=bq, wk=wk, bk=bk, w1=w1, b1=b1, w2=w2, b2=b2)

    prep_dot = prepare_attention_params(params, 'dot_product', E)
    prep_add = prepare_attention_params(params, 'additive', E)

    fwd_dot = jax.jit(lambda enc, dh, m: attention_layer_forward(prep_dot, 'dot_product', enc, dh, m))
    fwd_add = jax.jit(lambda enc, dh, m: attention_layer_forward(prep_add, 'additive', enc, dh, m))

    out_dot = fwd_dot(encoder_output, decoder_hidden, mask)
    out_add = fwd_add(encoder_output, decoder_hidden, mask)
    out_none = attention_layer_forward((), 'none', encoder_output, decoder_hidden, mask)
    jax.block_until_ready((out_dot, out_add, out_none))

    # Pure-JAX reference (mirrors the PyTorch forward exactly) for correctness check.
    def ref_forward(attention):
        if attention == 'dot_product':
            q = decoder_hidden @ wq.T + bq
            k = encoder_output @ wk.T + bk
            energy = jnp.einsum('be,ble->bl', q, k) / jnp.sqrt(jnp.float32(E))
        else:
            cat = jnp.concatenate(
                [encoder_output, jnp.broadcast_to(decoder_hidden[:, None, :], (B, L, D))], axis=-1)
            h = jax.nn.relu(cat @ w1.T + b1)
            energy = (h @ w2.T + b2)[..., 0]
        energy = jnp.where(mask, MASK_VALUE, energy)
        alphas = jax.nn.softmax(energy, axis=1)
        return jnp.einsum('bl,ble->be', alphas, encoder_output)[:, None, :]

    assert out_dot.shape == (B, 1, E) and out_add.shape == (B, 1, E) and out_none.shape == (B, 1, E)
    assert jnp.allclose(out_dot, ref_forward('dot_product'), atol=1e-4, rtol=1e-4)
    assert jnp.allclose(out_add, ref_forward('additive'), atol=1e-4, rtol=1e-4)
    assert jnp.allclose(out_none, encoder_output[:, -1, :][:, None, :])
    print("KERNEL_OK")
</pallas_src>

<mosaic_0001>
module attributes {stable_mosaic.version = 11 : i64} {
  func.func @dot_product_attention_kernel(%arg0: i32, %arg1: memref<8x12x128xf32, #tpu.memory_space<vmem>>, %arg2: memref<8x128xf32, #tpu.memory_space<vmem>>, %arg3: memref<8x1x12xf32, #tpu.memory_space<vmem>>, %arg4: memref<8x128xf32, #tpu.memory_space<vmem>>) attributes {dimension_semantics = [#tpu.dimension_semantics<parallel>], iteration_bounds = array<i64: 2>, scalar_prefetch = 0 : i64, scratch_operands = 0 : i64, tpu.core_type = #tpu.core_type<tc>, window_params = [{transform_indices = @transform_0, window_bounds = array<i64: 8, 12, 128>}, {transform_indices = @transform_1, window_bounds = array<i64: 8, 128>}, {transform_indices = @transform_2, window_bounds = array<i64: 8, 1, 12>}, {transform_indices = @transform_3, window_bounds = array<i64: 8, 128>}]} {
    %c0 = arith.constant 0 : index
    %c0_0 = arith.constant 0 : index
    %c0_1 = arith.constant 0 : index
    %0 = vector.load %arg1[%c0, %c0_0, %c0_1] : memref<8x12x128xf32, #tpu.memory_space<vmem>>, vector<8x12x128xf32>
    %c0_2 = arith.constant 0 : index
    %c0_3 = arith.constant 0 : index
    %1 = vector.load %arg2[%c0_2, %c0_3] : memref<8x128xf32, #tpu.memory_space<vmem>>, vector<8x128xf32>
    %2 = vector.shape_cast %1 : vector<8x128xf32> to vector<8x1x128xf32>
    "tpu.trace_start"() <{level = 10 : i32, message = "bqe,ble->bql"}> : () -> ()
    %cst = arith.constant dense<0.000000e+00> : vector<8x1x12xf32>
    %3 = tpu.matmul %2, %0, %cst {dimension_numbers = #tpu.dot_dimension_numbers<[2], [2], [1], [1], [0, 0, 0, 1, 1, 1], [0], [0]>} : vector<8x1x128xf32>, vector<8x12x128xf32>, vector<8x1x12xf32> -> vector<8x1x12xf32>
    "tpu.trace_stop"() : () -> ()
    %c0_4 = arith.constant 0 : index
    %c0_5 = arith.constant 0 : index
    %c0_6 = arith.constant 0 : index
    %4 = vector.load %arg3[%c0_4, %c0_5, %c0_6] : memref<8x1x12xf32, #tpu.memory_space<vmem>>, vector<8x1x12xf32>
    %5 = arith.addf %3, %4 : vector<8x1x12xf32>
    %cst_7 = arith.constant dense<0xFF800000> : vector<8x1xf32>
    %6 = vector.multi_reduction <maximumf>, %5, %cst_7 [2] : vector<8x1x12xf32> to vector<8x1xf32>
    %7 = vector.shape_cast %6 : vector<8x1xf32> to vector<8x1x1xf32>
    %8 = vector.broadcast %7 : vector<8x1x1xf32> to vector<8x1x12xf32>
    %9 = arith.subf %5, %8 : vector<8x1x12xf32>
    %10 = math.exp %9 : vector<8x1x12xf32>
    %cst_8 = arith.constant dense<0.000000e+00> : vector<8x1xf32>
    %11 = vector.multi_reduction <add>, %10, %cst_8 [2] : vector<8x1x12xf32> to vector<8x1xf32>
    %12 = vector.shape_cast %11 : vector<8x1xf32> to vector<8x1x1xf32>
    "tpu.trace_start"() <{level = 10 : i32, message = "bql,ble->bqe"}> : () -> ()
    %cst_9 = arith.constant dense<0.000000e+00> : vector<8x1x128xf32>
    %13 = tpu.matmul %10, %0, %cst_9 {dimension_numbers = #tpu.dot_dimension_numbers<[2], [1], [1], [2], [0, 0, 0, 1, 1, 2], [0], [0]>} : vector<8x1x12xf32>, vector<8x12x128xf32>, vector<8x1x128xf32> -> vector<8x1x128xf32>
    "tpu.trace_stop"() : () -> ()
    %14 = tpu.reciprocal %12 : vector<8x1x1xf32> -> vector<8x1x1xf32>
    %15 = vector.broadcast %14 : vector<8x1x1xf32> to vector<8x1x128xf32>
    %16 = arith.mulf %13, %15 : vector<8x1x128xf32>
    %17 = vector.shape_cast %16 : vector<8x1x128xf32> to vector<8x128xf32>
    %c0_10 = arith.constant 0 : index
    %c0_11 = arith.constant 0 : index
    %18 = vector.load %arg4[%c0_10, %c0_11] : memref<8x128xf32, #tpu.memory_space<vmem>>, vector<8x128xf32>
    tpu.vector_store %arg4[%c0_10, %c0_11], %17 {strides = array<i32>} : memref<8x128xf32, #tpu.memory_space<vmem>>, vector<8x128xf32>,
    return
  }
  func.func @transform_0(%arg0: i32) -> (i32, i32, i32) {
    %c0_i32 = arith.constant 0 : i32
    %c0_i32_0 = arith.constant 0 : i32
    %c0_i32_1 = arith.constant 0 : i32
    return %arg0, %c0_i32, %c0_i32_0 : i32, i32, i32
  }
  func.func @transform_1(%arg0: i32) -> (i32, i32) {
    %c0_i32 = arith.constant 0 : i32
    %c0_i32_0 = arith.constant 0 : i32
    return %arg0, %c0_i32 : i32, i32
  }
  func.func @transform_2(%arg0: i32) -> (i32, i32, i32) {
    %c0_i32 = arith.constant 0 : i32
    %c0_i32_0 = arith.constant 0 : i32
    %c0_i32_1 = arith.constant 0 : i32
    return %arg0, %c0_i32, %c0_i32_0 : i32, i32, i32
  }
  func.func @transform_3(%arg0: i32) -> (i32, i32) {
    %c0_i32 = arith.constant 0 : i32
    %c0_i32_0 = arith.constant 0 : i32
    return %arg0, %c0_i32 : i32, i32
  }
}

</mosaic_0001>

<llo_original>
// kernel: _lambda_.1
$region0: #{_lambda_.1}
  #allocation0 [shape = 'u32[]', space=smem, size = 0x4, offset = 0x4, fixed_abs, tag = 'smem constant byte address 0x4 - core index']
  #allocation1 [shape = 'u32[144,128]{1,0:T(1,128)}', space=vmem, size = 0x12000, scoped, tag = 'internal scratch']
  %s0 = inlined_call_operand.vmem [shape: f32[16,12,128], index: 0, kind: input, shape index: {}]
  %s1 = inlined_call_operand.vmem [shape: f32[16,128], index: 1, kind: input, shape index: {}]
  %s2 = inlined_call_operand.vmem [shape: f32[16,1,12], index: 2, kind: input, shape index: {}]
  %s3 = inlined_call_operand.hbm [shape: f32[16,128], index: 3, kind: output, shape index: {}]
  %s4 = sld [smem:[#allocation0]]
  $region45: #{_lambda_.1} parent=0
    _
  %s6 = ssub.s32 1, %s4
  %s7 = scalar_select 0, %s6, %s4
  $region1: #{_lambda_.1} parent=0
    #allocation2 [shape = 'u8[8192]{0}', space=vmem, size = 0x2000, scoped, tag = 'output window, operand 0']
    #allocation3 [shape = 's32[2]{0}', space=sflag, size = 0x8, scoped, tag = 'scoped memory for _lambda_.1']
    %8 = vsyncpa [#allocation3], 0
    %s9 = scalar_lea.sflag [#allocation3], 1
    %10 = vsyncpa %s9, 0
    loop: start=0, step=1, limit=4
    $region2: #{_lambda_.1} parent=1 // loop_pre_header
      _
    $region3: #{_lambda_.1} parent=1 // loop_header
      %s12 = sphi 0, %s16
      %p13 = scmp.ge.s32.totalorder %s12, 4
      %s22 = sphi 0, %s24
      %s25 = sphi 0, %s22
      %s26 = sphi 0, %s25
      %s42 = sphi 0, %s26
      %s48 = sphi 0, %s50
      %s51 = sphi 0, %s48
      %s52 = sphi 0, %s51
      %s68 = sphi 0, %s52
      %s74 = sphi 0, %s76
      %s77 = sphi 0, %s74
      %s78 = sphi 0, %s77
      %s94 = sphi 0, %s78
      %s100 = sphi 0, %s102
      %s103 = sphi 0, %s100
      %s104 = sphi 0, %s103
      %s120 = sphi 0, %s104
    $region4: #{_lambda_.1} parent=1 // loop_header_branch
      %15 = sbr.rel (%p13) target = $region8
    $region5: #{_lambda_.1} parent=1 // loop_body
      %s17 = ssub.s32 %s12, 1
      %s18 = ssub.s32 %s12, 2
      %s19 = sadd.s32 %s12, 1
      %s20 = ssub.s32 %s12, %s19
      %p21 = scmp.eq.s32.totalorder %s20, 0
      %s23 = sadd.s32 %s22, 1
      %s24 = scalar_select %p21, %s22, %s23
      %p27 = pneg %p21
      %p28 = scmp.eq.s32.totalorder %s12, 1
      %p29 = por %p27, %p28
      %p30 = scmp.ne.s32.totalorder %s22, %s25
      %p31 = scmp.eq.s32.totalorder %s12, 0
      %p32 = por %p30, %p31
      %p33 = scmp.ne.s32.totalorder %s22, %s25
      %p34 = scmp.eq.s32.totalorder %s17, 1
      %p35 = por %p33, %p34
      %p36 = scmp.ne.s32.totalorder %s25, %s26
      %p37 = scmp.eq.s32.totalorder %s17, 0
      %p38 = por %p36, %p37
      %p39 = scmp.ne.s32.totalorder %s25, %s26
      %p40 = scmp.eq.s32.totalorder %s18, 1
      %p41 = por %p39, %p40
      %p43 = scmp.ne.s32.totalorder %s26, %s42
      %p44 = scmp.eq.s32.totalorder %s18, 0
      %p45 = por %p43, %p44
      %s46 = ssub.s32 %s12, %s19
      %p47 = scmp.eq.s32.totalorder %s46, 0
      %s49 = sadd.s32 %s48, 1
      %s50 = scalar_select %p47, %s48, %s49
      %p53 = pneg %p47
      %p54 = scmp.eq.s32.totalorder %s12, 1
      %p55 = por %p53, %p54
      %p56 = scmp.ne.s32.totalorder %s48, %s51
      %p57 = scmp.eq.s32.totalorder %s12, 0
      %p58 = por %p56, %p57
      %p59 = scmp.ne.s32.totalorder %s48, %s51
      %p60 = scmp.eq.s32.totalorder %s17, 1
      %p61 = por %p59, %p60
      %p62 = scmp.ne.s32.totalorder %s51, %s52
      %p63 = scmp.eq.s32.totalorder %s17, 0
      %p64 = por %p62, %p63
      %p65 = scmp.ne.s32.totalorder %s51, %s52
      %p66 = scmp.eq.s32.totalorder %s18, 1
      %p67 = por %p65, %p66
      %p69 = scmp.ne.s32.totalorder %s52, %s68
      %p70 = scmp.eq.s32.totalorder %s18, 0
      %p71 = por %p69, %p70
      %s72 = ssub.s32 %s12, %s19
      %p73 = scmp.eq.s32.totalorder %s72, 0
      %s75 = sadd.s32 %s74, 1
      %s76 = scalar_select %p73, %s74, %s75
      %p79 = pneg %p73
      %p80 = scmp.eq.s32.totalorder %s12, 1
      %p81 = por %p79, %p80
      %p82 = scmp.ne.s32.totalorder %s74, %s77
      %p83 = scmp.eq.s32.totalorder %s12, 0
      %p84 = por %p82, %p83
      %p85 = scmp.ne.s32.totalorder %s74, %s77
      %p86 = scmp.eq.s32.totalorder %s17, 1
      %p87 = por %p85, %p86
      %p88 = scmp.ne.s32.totalorder %s77, %s78
      %p89 = scmp.eq.s32.totalorder %s17, 0
      %p90 = por %p88, %p89
      %p91 = scmp.ne.s32.totalorder %s77, %s78
      %p92 = scmp.eq.s32.totalorder %s18, 1
      %p93 = por %p91, %p92
      %p95 = scmp.ne.s32.totalorder %s78, %s94
      %p96 = scmp.eq.s32.totalorder %s18, 0
      %p97 = por %p95, %p96
      %s98 = ssub.s32 %s12, %s19
      %p99 = scmp.eq.s32.totalorder %s98, 0
      %s101 = sadd.s32 %s100, 1
      %s102 = scalar_select %p99, %s100, %s101
      %p105 = pneg %p99
      %p106 = scmp.eq.s32.totalorder %s12, 1
      %p107 = por %p105, %p106
      %p108 = scmp.ne.s32.totalorder %s100, %s103
      %p109 = scmp.eq.s32.totalorder %s12, 0
      %p110 = por %p108, %p109
      %p111 = scmp.ne.s32.totalorder %s100, %s103
      %p112 = scmp.eq.s32.totalorder %s17, 1
      %p113 = por %p111, %p112
      %p114 = scmp.ne.s32.totalorder %s103, %s104
      %p115 = scmp.eq.s32.totalorder %s17, 0
      %p116 = por %p114, %p115
      %p117 = scmp.ne.s32.totalorder %s103, %s104
      %p118 = scmp.eq.s32.totalorder %s18, 1
      %p119 = por %p117, %p118
      %p121 = scmp.ne.s32.totalorder %s104, %s120
      %p122 = scmp.eq.s32.totalorder %s18, 0
      %p123 = por %p121, %p122
      %p124 = scmp.le.s32.totalorder 1, %s12
      %p125 = scmp.lt.s32.totalorder %s12, 3
      %p126 = pnand %p124, %p125
      %p127 = pneg %p126
      // Predicated region
      $region9: #{_lambda_.1} parent=5 // pred_check
        _
      $region10: #{_lambda_.1} parent=5 // pred_check_branch
        %129 = sbr.rel (%p126) target = $region12
      $region11: #{_lambda_.1} parent=5 // pred_region
        %s130 = ssub.s32 %s12, 1
      $region12: #{_lambda_.1} parent=5 // pred_fallthru
        _
      %p131 = scmp.lt.s32.totalorder %s12, 2
      // Predicated region
      $region13: #{_lambda_.1} parent=5 // pred_check
        %p132 = pneg %p131
      $region14: #{_lambda_.1} parent=5 // pred_check_branch
        %134 = sbr.rel (%p132) target = $region16
      $region15: #{_lambda_.1} parent=5 // pred_region
        // Predicated region
        $region17: #{_lambda_.1} parent=15 // pred_check
          %p135 = pneg %p32
        $region18: #{_lambda_.1} parent=15 // pred_check_branch
          %137 = sbr.rel (%p135) target = $region20
        $region19: #{_lambda_.1} parent=15 // pred_region
          %s138 = smul.u32 8, %s12
          %p139 = scmp.lt.s32.totalorder %s138, 15
          %s140 = scalar_select %p139, %s138, 15
          %s141 = smul.addr %s140, 2
          %s142 = smul.addr %s141, 8
          %s143 = scalar_lea.vmem %s0, %s142
          %s144 = smul.u32 8, %s12
        $region20: #{_lambda_.1} parent=15 // pred_fallthru
          _
        // Predicated region
        $region21: #{_lambda_.1} parent=15 // pred_check
          %p145 = pneg %p58
        $region22: #{_lambda_.1} parent=15 // pred_check_branch
          %147 = sbr.rel (%p145) target = $region24
        $region23: #{_lambda_.1} parent=15 // pred_region
          %p148 = scmp.lt.s32.totalorder %s12, 1
          %s149 = scalar_select %p148, %s12, 1
          %s150 = smul.addr %s149, 8
          %s151 = scalar_lea.vmem %s1, %s150
        $region24: #{_lambda_.1} parent=15 // pred_fallthru
          _
        // Predicated region
        $region25: #{_lambda_.1} parent=15 // pred_check
          %p152 = pneg %p84
        $region26: #{_lambda_.1} parent=15 // pred_check_branch
          %154 = sbr.rel (%p152) target = $region28
        $region27: #{_lambda_.1} parent=15 // pred_region
          %s155 = smul.u32 8, %s12
          %p156 = scmp.lt.s32.totalorder %s155, 15
          %s157 = scalar_select %p156, %s155, 15
          %s158 = scalar_lea.vmem %s2, %s157
          %s159 = smul.u32 8, %s12
        $region28: #{_lambda_.1} parent=15 // pred_fallthru
          _
      $region16: #{_lambda_.1} parent=5 // pred_fallthru
        _
      %p160 = scmp.le.s32.totalorder 1, %s12
      %p161 = scmp.lt.s32.totalorder %s12, 3
      %p162 = pnand %p160, %p161
      %p163 = pneg %p162
      // Predicated region
      $region29: #{_lambda_.1} parent=5 // pred_check
        _
      $region30: #{_lambda_.1} parent=5 // pred_check_branch
        %165 = sbr.rel (%p162) target = $region32
      $region31: #{_lambda_.1} parent=5 // pred_region
        %s166 = ssub.s32 %s12, 1
        %s167 = smul.u32 8, %s17
        %p168 = scmp.lt.s32.totalorder %s167, 15
        %s169 = scalar_select %p168, %s167, 15
        %s170 = smul.addr %s169, 2
        %s171 = smul.addr %s170, 8
        %s172 = scalar_lea.vmem %s0, %s171
        %p173 = pneg %p38
        %p174 = pneg %p35
        %p175 = scmp.lt.s32.totalorder %s17, 1
        %s176 = scalar_select %p175, %s17, 1
        %s177 = smul.addr %s176, 8
        %s178 = scalar_lea.vmem %s1, %s177
        %p179 = pneg %p64
        %p180 = pneg %p61
        %s181 = smul.u32 8, %s17
        %p182 = scmp.lt.s32.totalorder %s181, 15
        %s183 = scalar_select %p182, %s181, 15
        %s184 = scalar_lea.vmem %s2, %s183
        %p185 = pneg %p90
        %p186 = pneg %p87
        %p187 = pneg %p116
        %p188 = pneg %p113
        %s189 = sand.u32 %s103, 1
        %s190 = scalar_lea.sflag [#allocation3], %s189
        %s191 = sand.u32 %s103, 1
        %s192 = smul.addr %s191, 8
        %s193 = scalar_lea.vmem [#allocation2], %s192
        %s194 = smul.u32 8, %s17
        %p195 = scmp.lt.s32.totalorder %s194, 15
        %s196 = scalar_select %p195, %s194, 15
        %s197 = smul.addr %s196, 2
        %s198 = smul.addr %s197, 8
        %s199 = scalar_lea.vmem %s0, %s198
        %s200 = smul.u32 8, %s17
        %p201 = scmp.lt.s32.totalorder %s17, 1
        %s202 = scalar_select %p201, %s17, 1
        %s203 = smul.addr %s202, 8
        %s204 = scalar_lea.vmem %s1, %s203
        %s205 = smul.u32 8, %s17
        %p206 = scmp.lt.s32.totalorder %s205, 15
        %s207 = scalar_select %p206, %s205, 15
        %s208 = scalar_lea.vmem %s2, %s207
        %s209 = smul.u32 8, %s17
        %v210 = vld [vmem:[%s199] sm:$0xff]
        %v211 = vld [vmem:[%s199 + $0x8] sm:$0xf]
        %v212 = vld [vmem:[%s199 + $0x10] sm:$0xff]
        %v213 = vld [vmem:[%s199 + $0x18] sm:$0xf]
        %v214 = vld [vmem:[%s199 + $0x20] sm:$0xff]
        %v215 = vld [vmem:[%s199 + $0x28] sm:$0xf]
        %v216 = vld [vmem:[%s199 + $0x30] sm:$0xff]
        %v217 = vld [vmem:[%s199 + $0x38] sm:$0xf]
        %v218 = vld [vmem:[%s199 + $0x40] sm:$0xff]
        %v219 = vld [vmem:[%s199 + $0x48] sm:$0xf]
        %v220 = vld [vmem:[%s199 + $0x50] sm:$0xff]
        %v221 = vld [vmem:[%s199 + $0x58] sm:$0xf]
        %v222 = vld [vmem:[%s199 + $0x60] sm:$0xff]
        %v223 = vld [vmem:[%s199 + $0x68] sm:$0xf]
        %v224 = vld [vmem:[%s199 + $0x70] sm:$0xff]
        %v225 = vld [vmem:[%s199 + $0x78] sm:$0xf]
        %v226 = vld [vmem:[%s204] sm:$0xff]
        %v228 = vcombine.high %v226, %v226
        %v230 = vunpack.c.l.s4 1966171168
        %v231 = vunpack.c.0.s8 %v230
        %v232 = vlaneseq
        %v233 = vshrl.u32 %v232, 7
        %v234 = vsub.s32 %v231, %v233
        %v235 = vrot.slane %v226, %v234
        %v237 = vunpack.c.l.s4 1966171168
        %v238 = vunpack.c.0.s8 %v237
        %v239 = vlaneseq
        %v240 = vshrl.u32 %v239, 7
        %v241 = vsub.s32 %v238, %v240
        %v242 = vrot.slane %v228, %v241
        %v243 = vcombine.high %v235, %v235
        %v244 = vcombine.high %v242, %v242
        %v246 = vunpack.c.l.s4 1966171168
        %v247 = vunpack.c.0.s8 %v246
        %v248 = vlaneseq
        %v249 = vshrl.u32 %v248, 7
        %v250 = vsub.s32 %v247, %v249
        %v251 = vrot.slane %v235, %v250
        %v253 = vunpack.c.l.s4 1966171168
        %v254 = vunpack.c.0.s8 %v253
        %v255 = vlaneseq
        %v256 = vshrl.u32 %v255, 7
        %v257 = vsub.s32 %v254, %v256
        %v258 = vrot.slane %v242, %v257
        %v260 = vunpack.c.l.s4 1966171168
        %v261 = vunpack.c.0.s8 %v260
        %v262 = vlaneseq
        %v263 = vshrl.u32 %v262, 7
        %v264 = vsub.s32 %v261, %v263
        %v265 = vrot.slane %v243, %v264
        %v267 = vunpack.c.l.s4 1966171168
        %v268 = vunpack.c.0.s8 %v267
        %v269 = vlaneseq
        %v270 = vshrl.u32 %v269, 7
        %v271 = vsub.s32 %v268, %v270
        %v272 = vrot.slane %v244, %v271
        %v273 = vcombine.high %v251, %v251
        %v274 = vcombine.high %v258, %v258
        %v275 = vcombine.high %v265, %v265
        %v276 = vcombine.high %v272, %v272
        %v285 = vld [vmem:[%s208] sm:$0x1]
        %v286 = vld [vmem:[%s208 + $0x1] sm:$0x1]
        %v287 = vld [vmem:[%s208 + $0x2] sm:$0x1]
        %v288 = vld [vmem:[%s208 + $0x3] sm:$0x1]
        %v289 = vld [vmem:[%s208 + $0x4] sm:$0x1]
        %v290 = vld [vmem:[%s208 + $0x5] sm:$0x1]
        %v291 = vld [vmem:[%s208 + $0x6] sm:$0x1]
        %v292 = vld [vmem:[%s208 + $0x7] sm:$0x1]
        %293 = vmatprep.subr.mxu0 0.0
        %294 = vmatpush1.xpose.msra.mxu0 %v210
        %295 = vmatprep.subr.mxu0 0.0
        %296 = vmatpush1.xpose.msra.mxu0 %v211
        %297 = vmatprep.subr.mxu0 0.0
        %298 = vmatpush1.xpose.msra.mxu0 0.0
        %299 = vmatprep.subr.mxu0 0.0
        %300 = vmatpush1.xpose.msra.mxu0 0.0
        %301 = vmatprep.subr.mxu0 0.0
        %302 = vmatpush1.xpose.msra.mxu0 0.0
        %303 = vmatprep.subr.mxu0 0.0
        %304 = vmatpush1.xpose.msra.mxu0 0.0
        %305 = vmatprep.subr.mxu0 0.0
        %306 = vmatpush1.xpose.msra.mxu0 0.0
        %307 = vmatprep.subr.mxu0 0.0
        %308 = vmatpush1.xpose.msra.mxu0 0.0
        %309 = vmatprep.subr.mxu0 0.0
        %310 = vmatpush1.xpose.msra.mxu0 0.0
        %311 = vmatprep.subr.mxu0 0.0
        %312 = vmatpush1.xpose.msra.mxu0 0.0
        %313 = vmatprep.subr.mxu0 0.0
        %314 = vmatpush1.xpose.msra.mxu0 0.0
        %315 = vmatprep.subr.mxu0 0.0
        %316 = vmatpush1.xpose.msra.mxu0 0.0
        %317 = vmatprep.subr.mxu0 0.0
        %318 = vmatpush1.xpose.msra.mxu0 0.0
        %319 = vmatprep.subr.mxu0 0.0
        %320 = vmatpush1.xpose.msra.mxu0 0.0
        %321 = vmatprep.subr.mxu0 0.0
        %322 = vmatpush1.xpose.msra.mxu0 0.0
        %323 = vmatprep.subr.mxu0 0.0
        %324 = vmatpush1.xpose.msra.mxu0 0.0
        %325 = vmatprep.subr.mxu0 0.0
        %326 = vmatpush1.xpose.msra.mxu0 0.0
        %327 = vmatprep.subr.mxu0 0.0
        %328 = vmatpush1.xpose.msra.mxu0 0.0
        %329 = vmatprep.subr.mxu0 0.0
        %330 = vmatpush1.xpose.msra.mxu0 0.0
        %331 = vmatprep.subr.mxu0 0.0
        %332 = vmatpush1.xpose.msra.mxu0 0.0
        %333 = vmatprep.subr.mxu0 0.0
        %334 = vmatpush1.xpose.msra.mxu0 0.0
        %335 = vmatprep.subr.mxu0 0.0
        %336 = vmatpush1.xpose.msra.mxu0 0.0
        %337 = vmatprep.subr.mxu0 0.0
        %338 = vmatpush1.xpose.msra.mxu0 0.0
        %339 = vmatprep.subr.mxu0 0.0
        %340 = vmatpush1.xpose.msra.mxu0 0.0
        %341 = vmatprep.subr.mxu0 0.0
        %342 = vmatpush1.xpose.msra.mxu0 0.0
        %343 = vmatprep.subr.mxu0 0.0
        %344 = vmatpush1.xpose.msra.mxu0 0.0
        %345 = vmatprep.subr.mxu0 0.0
        %346 = vmatpush1.xpose.msra.mxu0 0.0
        %347 = vmatprep.subr.mxu0 0.0
        %348 = vmatpush1.xpose.msra.mxu0 0.0
        %349 = vmatprep.subr.mxu0 0.0
        %350 = vmatpush1.xpose.msra.mxu0 0.0
        %351 = vmatprep.subr.mxu0 0.0
        %352 = vmatpush1.xpose.msra.mxu0 0.0
        %353 = vmatprep.subr.mxu0 0.0
        %354 = vmatpush1.xpose.msra.mxu0 0.0
        %355 = vmatprep.subr.mxu0 0.0
        %356 = vmatpush1.xpose.msra.mxu0 0.0
        %357 = vmatprep.mubr.f32.mxu0 0.0
        %358 = vmatmul.mubr.f32.gmra.mrb[0].mxu0 %v251
        %v359 = vpop.f32.mrb[0].mxu0
        %v360 = vadd.f32 %v285, %v359
        %v361 = vpop.f32.mrb[0].mxu0
        %362 = vdwg.mxu0
        %363 = vmatprep.subr.mxu0 0.0
        %364 = vmatpush1.xpose.msra.mxu0 %v212
        %365 = vmatprep.subr.mxu0 0.0
        %366 = vmatpush1.xpose.msra.mxu0 %v213
        %367 = vmatprep.subr.mxu0 0.0
        %368 = vmatpush1.xpose.msra.mxu0 0.0
        %369 = vmatprep.subr.mxu0 0.0
        %370 = vmatpush1.xpose.msra.mxu0 0.0
        %371 = vmatprep.subr.mxu0 0.0
        %372 = vmatpush1.xpose.msra.mxu0 0.0
        %373 = vmatprep.subr.mxu0 0.0
        %374 = vmatpush1.xpose.msra.mxu0 0.0
        %375 = vmatprep.subr.mxu0 0.0
        %376 = vmatpush1.xpose.msra.mxu0 0.0
        %377 = vmatprep.subr.mxu0 0.0
        %378 = vmatpush1.xpose.msra.mxu0 0.0
        %379 = vmatprep.subr.mxu0 0.0
        %380 = vmatpush1.xpose.msra.mxu0 0.0
        %381 = vmatprep.subr.mxu0 0.0
        %382 = vmatpush1.xpose.msra.mxu0 0.0
        %383 = vmatprep.subr.mxu0 0.0
        %384 = vmatpush1.xpose.msra.mxu0 0.0
        %385 = vmatprep.subr.mxu0 0.0
        %386 = vmatpush1.xpose.msra.mxu0 0.0
        %387 = vmatprep.subr.mxu0 0.0
        %388 = vmatpush1.xpose.msra.mxu0 0.0
        %389 = vmatprep.subr.mxu0 0.0
        %390 = vmatpush1.xpose.msra.mxu0 0.0
        %391 = vmatprep.subr.mxu0 0.0
        %392 = vmatpush1.xpose.msra.mxu0 0.0
        %393 = vmatprep.subr.mxu0 0.0
        %394 = vmatpush1.xpose.msra.mxu0 0.0
        %395 = vmatprep.subr.mxu0 0.0
        %396 = vmatpush1.xpose.msra.mxu0 0.0
        %397 = vmatprep.subr.mxu0 0.0
        %398 = vmatpush1.xpose.msra.mxu0 0.0
        %399 = vmatprep.subr.mxu0 0.0
        %400 = vmatpush1.xpose.msra.mxu0 0.0
        %401 = vmatprep.subr.mxu0 0.0
        %402 = vmatpush1.xpose.msra.mxu0 0.0
        %403 = vmatprep.subr.mxu0 0.0
        %404 = vmatpush1.xpose.msra.mxu0 0.0
        %405 = vmatprep.subr.mxu0 0.0
        %406 = vmatpush1.xpose.msra.mxu0 0.0
        %407 = vmatprep.subr.mxu0 0.0
        %408 = vmatpush1.xpose.msra.mxu0 0.0
        %409 = vmatprep.subr.mxu0 0.0
        %410 = vmatpush1.xpose.msra.mxu0 0.0
        %411 = vmatprep.subr.mxu0 0.0
        %412 = vmatpush1.xpose.msra.mxu0 0.0
        %413 = vmatprep.subr.mxu0 0.0
        %414 = vmatpush1.xpose.msra.mxu0 0.0
        %415 = vmatprep.subr.mxu0 0.0
        %416 = vmatpush1.xpose.msra.mxu0 0.0
        %417 = vmatprep.subr.mxu0 0.0
        %418 = vmatpush1.xpose.msra.mxu0 0.0
        %419 = vmatprep.subr.mxu0 0.0
        %420 = vmatpush1.xpose.msra.mxu0 0.0
        %421 = vmatprep.subr.mxu0 0.0
        %422 = vmatpush1.xpose.msra.mxu0 0.0
        %423 = vmatprep.subr.mxu0 0.0
        %424 = vmatpush1.xpose.msra.mxu0 0.0
        %425 = vmatprep.subr.mxu0 0.0
        %426 = vmatpush1.xpose.msra.mxu0 0.0
        %427 = vmatprep.mubr.f32.mxu0 0.0
        %428 = vmatmul.mubr.f32.gmra.mrb[0].mxu0 %v265
        %v429 = vpop.f32.mrb[0].mxu0
        %v430 = vadd.f32 %v286, %v429
        %v431 = vpop.f32.mrb[0].mxu0
        %432 = vdwg.mxu0
        %433 = vmatprep.subr.mxu0 0.0
        %434 = vmatpush1.xpose.msra.mxu0 %v214
        %435 = vmatprep.subr.mxu0 0.0
        %436 = vmatpush1.xpose.msra.mxu0 %v215
        %437 = vmatprep.subr.mxu0 0.0
        %438 = vmatpush1.xpose.msra.mxu0 0.0
        %439 = vmatprep.subr.mxu0 0.0
        %440 = vmatpush1.xpose.msra.mxu0 0.0
        %441 = vmatprep.subr.mxu0 0.0
        %442 = vmatpush1.xpose.msra.mxu0 0.0
        %443 = vmatprep.subr.mxu0 0.0
        %444 = vmatpush1.xpose.msra.mxu0 0.0
        %445 = vmatprep.subr.mxu0 0.0
        %446 = vmatpush1.xpose.msra.mxu0 0.0
        %447 = vmatprep.subr.mxu0 0.0
        %448 = vmatpush1.xpose.msra.mxu0 0.0
        %449 = vmatprep.subr.mxu0 0.0
        %450 = vmatpush1.xpose.msra.mxu0 0.0
        %451 = vmatprep.subr.mxu0 0.0
        %452 = vmatpush1.xpose.msra.mxu0 0.0
        %453 = vmatprep.subr.mxu0 0.0
        %454 = vmatpush1.xpose.msra.mxu0 0.0
        %455 = vmatprep.subr.mxu0 0.0
        %456 = vmatpush1.xpose.msra.mxu0 0.0
        %457 = vmatprep.subr.mxu0 0.0
        %458 = vmatpush1.xpose.msra.mxu0 0.0
        %459 = vmatprep.subr.mxu0 0.0
        %460 = vmatpush1.xpose.msra.mxu0 0.0
        %461 = vmatprep.subr.mxu0 0.0
        %462 = vmatpush1.xpose.msra.mxu0 0.0
        %463 = vmatprep.subr.mxu0 0.0
        %464 = vmatpush1.xpose.msra.mxu0 0.0
        %465 = vmatprep.subr.mxu0 0.0
        %466 = vmatpush1.xpose.msra.mxu0 0.0
        %467 = vmatprep.subr.mxu0 0.0
        %468 = vmatpush1.xpose.msra.mxu0 0.0
        %469 = vmatprep.subr.mxu0 0.0
        %470 = vmatpush1.xpose.msra.mxu0 0.0
        %471 = vmatprep.subr.mxu0 0.0
        %472 = vmatpush1.xpose.msra.mxu0 0.0
        %473 = vmatprep.subr.mxu0 0.0
        %474 = vmatpush1.xpose.msra.mxu0 0.0
        %475 = vmatprep.subr.mxu0 0.0
        %476 = vmatpush1.xpose.msra.mxu0 0.0
        %477 = vmatprep.subr.mxu0 0.0
        %478 = vmatpush1.xpose.msra.mxu0 0.0
        %479 = vmatprep.subr.mxu0 0.0
        %480 = vmatpush1.xpose.msra.mxu0 0.0
        %481 = vmatprep.subr.mxu0 0.0
        %482 = vmatpush1.xpose.msra.mxu0 0.0
        %483 = vmatprep.subr.mxu0 0.0
        %484 = vmatpush1.xpose.msra.mxu0 0.0
        %485 = vmatprep.subr.mxu0 0.0
        %486 = vmatpush1.xpose.msra.mxu0 0.0
        %487 = vmatprep.subr.mxu0 0.0
        %488 = vmatpush1.xpose.msra.mxu0 0.0
        %489 = vmatprep.subr.mxu0 0.0
        %490 = vmatpush1.xpose.msra.mxu0 0.0
        %491 = vmatprep.subr.mxu0 0.0
        %492 = vmatpush1.xpose.msra.mxu0 0.0
        %493 = vmatprep.subr.mxu0 0.0
        %494 = vmatpush1.xpose.msra.mxu0 0.0
        %495 = vmatprep.subr.mxu0 0.0
        %496 = vmatpush1.xpose.msra.mxu0 0.0
        %497 = vmatprep.mubr.f32.mxu0 0.0
        %498 = vmatmul.mubr.f32.gmra.mrb[0].mxu0 %v273
        %v499 = vpop.f32.mrb[0].mxu0
        %v500 = vadd.f32 %v287, %v499
        %v501 = vpop.f32.mrb[0].mxu0
        %502 = vdwg.mxu0
        %503 = vmatprep.subr.mxu0 0.0
        %504 = vmatpush1.xpose.msra.mxu0 %v216
        %505 = vmatprep.subr.mxu0 0.0
        %506 = vmatpush1.xpose.msra.mxu0 %v217
        %507 = vmatprep.subr.mxu0 0.0
        %508 = vmatpush1.xpose.msra.mxu0 0.0
        %509 = vmatprep.subr.mxu0 0.0
        %510 = vmatpush1.xpose.msra.mxu0 0.0
        %511 = vmatprep.subr.mxu0 0.0
        %512 = vmatpush1.xpose.msra.mxu0 0.0
        %513 = vmatprep.subr.mxu0 0.0
        %514 = vmatpush1.xpose.msra.mxu0 0.0
        %515 = vmatprep.subr.mxu0 0.0
        %516 = vmatpush1.xpose.msra.mxu0 0.0
        %517 = vmatprep.subr.mxu0 0.0
        %518 = vmatpush1.xpose.msra.mxu0 0.0
        %519 = vmatprep.subr.mxu0 0.0
        %520 = vmatpush1.xpose.msra.mxu0 0.0
        %521 = vmatprep.subr.mxu0 0.0
        %522 = vmatpush1.xpose.msra.mxu0 0.0
        %523 = vmatprep.subr.mxu0 0.0
        %524 = vmatpush1.xpose.msra.mxu0 0.0
        %525 = vmatprep.subr.mxu0 0.0
        %526 = vmatpush1.xpose.msra.mxu0 0.0
        %527 = vmatprep.subr.mxu0 0.0
        %528 = vmatpush1.xpose.msra.mxu0 0.0
        %529 = vmatprep.subr.mxu0 0.0
        %530 = vmatpush1.xpose.msra.mxu0 0.0
        %531 = vmatprep.subr.mxu0 0.0
        %532 = vmatpush1.xpose.msra.mxu0 0.0
        %533 = vmatprep.subr.mxu0 0.0
        %534 = vmatpush1.xpose.msra.mxu0 0.0
        %535 = vmatprep.subr.mxu0 0.0
        %536 = vmatpush1.xpose.msra.mxu0 0.0
        %537 = vmatprep.subr.mxu0 0.0
        %538 = vmatpush1.xpose.msra.mxu0 0.0
        %539 = vmatprep.subr.mxu0 0.0
        %540 = vmatpush1.xpose.msra.mxu0 0.0
        %541 = vmatprep.subr.mxu0 0.0
        %542 = vmatpush1.xpose.msra.mxu0 0.0
        %543 = vmatprep.subr.mxu0 0.0
        %544 = vmatpush1.xpose.msra.mxu0 0.0
        %545 = vmatprep.subr.mxu0 0.0
        %546 = vmatpush1.xpose.msra.mxu0 0.0
        %547 = vmatprep.subr.mxu0 0.0
        %548 = vmatpush1.xpose.msra.mxu0 0.0
        %549 = vmatprep.subr.mxu0 0.0
        %550 = vmatpush1.xpose.msra.mxu0 0.0
        %551 = vmatprep.subr.mxu0 0.0
        %552 = vmatpush1.xpose.msra.mxu0 0.0
        %553 = vmatprep.subr.mxu0 0.0
        %554 = vmatpush1.xpose.msra.mxu0 0.0
        %555 = vmatprep.subr.mxu0 0.0
        %556 = vmatpush1.xpose.msra.mxu0 0.0
        %557 = vmatprep.subr.mxu0 0.0
        %558 = vmatpush1.xpose.msra.mxu0 0.0
        %559 = vmatprep.subr.mxu0 0.0
        %560 = vmatpush1.xpose.msra.mxu0 0.0
        %561 = vmatprep.subr.mxu0 0.0
        %562 = vmatpush1.xpose.msra.mxu0 0.0
        %563 = vmatprep.subr.mxu0 0.0
        %564 = vmatpush1.xpose.msra.mxu0 0.0
        %565 = vmatprep.subr.mxu0 0.0
        %566 = vmatpush1.xpose.msra.mxu0 0.0
        %567 = vmatprep.mubr.f32.mxu0 0.0
        %568 = vmatmul.mubr.f32.gmra.mrb[0].mxu0 %v275
        %v569 = vpop.f32.mrb[0].mxu0
        %v570 = vadd.f32 %v288, %v569
        %v571 = vpop.f32.mrb[0].mxu0
        %572 = vdwg.mxu0
        %573 = vmatprep.subr.mxu0 0.0
        %574 = vmatpush1.xpose.msra.mxu0 %v218
        %575 = vmatprep.subr.mxu0 0.0
        %576 = vmatpush1.xpose.msra.mxu0 %v219
        %577 = vmatprep.subr.mxu0 0.0
        %578 = vmatpush1.xpose.msra.mxu0 0.0
        %579 = vmatprep.subr.mxu0 0.0
        %580 = vmatpush1.xpose.msra.mxu0 0.0
        %581 = vmatprep.subr.mxu0 0.0
        %582 = vmatpush1.xpose.msra.mxu0 0.0
        %583 = vmatprep.subr.mxu0 0.0
        %584 = vmatpush1.xpose.msra.mxu0 0.0
        %585 = vmatprep.subr.mxu0 0.0
        %586 = vmatpush1.xpose.msra.mxu0 0.0
        %587 = vmatprep.subr.mxu0 0.0
        %588 = vmatpush1.xpose.msra.mxu0 0.0
        %589 = vmatprep.subr.mxu0 0.0
        %590 = vmatpush1.xpose.msra.mxu0 0.0
        %591 = vmatprep.subr.mxu0 0.0
        %592 = vmatpush1.xpose.msra.mxu0 0.0
        %593 = vmatprep.subr.mxu0 0.0
        %594 = vmatpush1.xpose.msra.mxu0 0.0
        %595 = vmatprep.subr.mxu0 0.0
        %596 = vmatpush1.xpose.msra.mxu0 0.0
        %597 = vmatprep.subr.mxu0 0.0
        %598 = vmatpush1.xpose.msra.mxu0 0.0
        %599 = vmatprep.subr.mxu0 0.0
        %600 = vmatpush1.xpose.msra.mxu0 0.0
        %601 = vmatprep.subr.mxu0 0.0
        %602 = vmatpush1.xpose.msra.mxu0 0.0
        %603 = vmatprep.subr.mxu0 0.0
        %604 = vmatpush1.xpose.msra.mxu0 0.0
        %605 = vmatprep.subr.mxu0 0.0
        %606 = vmatpush1.xpose.msra.mxu0 0.0
        %607 = vmatprep.subr.mxu0 0.0
        %608 = vmatpush1.xpose.msra.mxu0 0.0
        %609 = vmatprep.subr.mxu0 0.0
        %610 = vmatpush1.xpose.msra.mxu0 0.0
        %611 = vmatprep.subr.mxu0 0.0
        %612 = vmatpush1.xpose.msra.mxu0 0.0
        %613 = vmatprep.subr.mxu0 0.0
        %614 = vmatpush1.xpose.msra.mxu0 0.0
        %615 = vmatprep.subr.mxu0 0.0
        %616 = vmatpush1.xpose.msra.mxu0 0.0
        %617 = vmatprep.subr.mxu0 0.0
        %618 = vmatpush1.xpose.msra.mxu0 0.0
        %619 = vmatprep.subr.mxu0 0.0
        %620 = vmatpush1.xpose.msra.mxu0 0.0
        %621 = vmatprep.subr.mxu0 0.0
        %622 = vmatpush1.xpose.msra.mxu0 0.0
        %623 = vmatprep.subr.mxu0 0.0
        %624 = vmatpush1.xpose.msra.mxu0 0.0
        %625 = vmatprep.subr.mxu0 0.0
        %626 = vmatpush1.xpose.msra.mxu0 0.0
        %627 = vmatprep.subr.mxu0 0.0
        %628 = vmatpush1.xpose.msra.mxu0 0.0
        %629 = vmatprep.subr.mxu0 0.0
        %630 = vmatpush1.xpose.msra.mxu0 0.0
        %631 = vmatprep.subr.mxu0 0.0
        %632 = vmatpush1.xpose.msra.mxu0 0.0
        %633 = vmatprep.subr.mxu0 0.0
        %634 = vmatpush1.xpose.msra.mxu0 0.0
        %635 = vmatprep.subr.mxu0 0.0
        %636 = vmatpush1.xpose.msra.mxu0 0.0
        %637 = vmatprep.mubr.f32.mxu0 0.0
        %638 = vmatmul.mubr.f32.gmra.mrb[0].mxu0 %v258
        %v639 = vpop.f32.mrb[0].mxu0
        %v640 = vadd.f32 %v289, %v639
        %v641 = vpop.f32.mrb[0].mxu0
        %642 = vdwg.mxu0
        %643 = vmatprep.subr.mxu0 0.0
        %644 = vmatpush1.xpose.msra.mxu0 %v220
        %645 = vmatprep.subr.mxu0 0.0
        %646 = vmatpush1.xpose.msra.mxu0 %v221
        %647 = vmatprep.subr.mxu0 0.0
        %648 = vmatpush1.xpose.msra.mxu0 0.0
        %649 = vmatprep.subr.mxu0 0.0
        %650 = vmatpush1.xpose.msra.mxu0 0.0
        %651 = vmatprep.subr.mxu0 0.0
        %652 = vmatpush1.xpose.msra.mxu0 0.0
        %653 = vmatprep.subr.mxu0 0.0
        %654 = vmatpush1.xpose.msra.mxu0 0.0
        %655 = vmatprep.subr.mxu0 0.0
        %656 = vmatpush1.xpose.msra.mxu0 0.0
        %657 = vmatprep.subr.mxu0 0.0
        %658 = vmatpush1.xpose.msra.mxu0 0.0
        %659 = vmatprep.subr.mxu0 0.0
        %660 = vmatpush1.xpose.msra.mxu0 0.0
        %661 = vmatprep.subr.mxu0 0.0
        %662 = vmatpush1.xpose.msra.mxu0 0.0
        %663 = vmatprep.subr.mxu0 0.0
        %664 = vmatpush1.xpose.msra.mxu0 0.0
        %665 = vmatprep.subr.mxu0 0.0
        %666 = vmatpush1.xpose.msra.mxu0 0.0
        %667 = vmatprep.subr.mxu0 0.0
        %668 = vmatpush1.xpose.msra.mxu0 0.0
        %669 = vmatprep.subr.mxu0 0.0
        %670 = vmatpush1.xpose.msra.mxu0 0.0
        %671 = vmatprep.subr.mxu0 0.0
        %672 = vmatpush1.xpose.msra.mxu0 0.0
        %673 = vmatprep.subr.mxu0 0.0
        %674 = vmatpush1.xpose.msra.mxu0 0.0
        %675 = vmatprep.subr.mxu0 0.0
        %676 = vmatpush1.xpose.msra.mxu0 0.0
        %677 = vmatprep.subr.mxu0 0.0
        %678 = vmatpush1.xpose.msra.mxu0 0.0
        %679 = vmatprep.subr.mxu0 0.0
        %680 = vmatpush1.xpose.msra.mxu0 0.0
        %681 = vmatprep.subr.mxu0 0.0
        %682 = vmatpush1.xpose.msra.mxu0 0.0
        %683 = vmatprep.subr.mxu0 0.0
        %684 = vmatpush1.xpose.msra.mxu0 0.0
        %685 = vmatprep.subr.mxu0 0.0
        %686 = vmatpush1.xpose.msra.mxu0 0.0
        %687 = vmatprep.subr.mxu0 0.0
        %688 = vmatpush1.xpose.msra.mxu0 0.0
        %689 = vmatprep.subr.mxu0 0.0
        %690 = vmatpush1.xpose.msra.mxu0 0.0
        %691 = vmatprep.subr.mxu0 0.0
        %692 = vmatpush1.xpose.msra.mxu0 0.0
        %693 = vmatprep.subr.mxu0 0.0
        %694 = vmatpush1.xpose.msra.mxu0 0.0
        %695 = vmatprep.subr.mxu0 0.0
        %696 = vmatpush1.xpose.msra.mxu0 0.0
        %697 = vmatprep.subr.mxu0 0.0
        %698 = vmatpush1.xpose.msra.mxu0 0.0
        %699 = vmatprep.subr.mxu0 0.0
        %700 = vmatpush1.xpose.msra.mxu0 0.0
        %701 = vmatprep.subr.mxu0 0.0
        %702 = vmatpush1.xpose.msra.mxu0 0.0
        %703 = vmatprep.subr.mxu0 0.0
        %704 = vmatpush1.xpose.msra.mxu0 0.0
        %705 = vmatprep.subr.mxu0 0.0
        %706 = vmatpush1.xpose.msra.mxu0 0.0
        %707 = vmatprep.mubr.f32.mxu0 0.0
        %708 = vmatmul.mubr.f32.gmra.mrb[0].mxu0 %v272
        %v709 = vpop.f32.mrb[0].mxu0
        %v710 = vadd.f32 %v290, %v709
        %v711 = vpop.f32.mrb[0].mxu0
        %712 = vdwg.mxu0
        %713 = vmatprep.subr.mxu0 0.0
        %714 = vmatpush1.xpose.msra.mxu0 %v222
        %715 = vmatprep.subr.mxu0 0.0
        %716 = vmatpush1.xpose.msra.mxu0 %v223
        %717 = vmatprep.subr.mxu0 0.0
        %718 = vmatpush1.xpose.msra.mxu0 0.0
        %719 = vmatprep.subr.mxu0 0.0
        %720 = vmatpush1.xpose.msra.mxu0 0.0
        %721 = vmatprep.subr.mxu0 0.0
        %722 = vmatpush1.xpose.msra.mxu0 0.0
        %723 = vmatprep.subr.mxu0 0.0
        %724 = vmatpush1.xpose.msra.mxu0 0.0
        %725 = vmatprep.subr.mxu0 0.0
        %726 = vmatpush1.xpose.msra.mxu0 0.0
        %727 = vmatprep.subr.mxu0 0.0
        %728 = vmatpush1.xpose.msra.mxu0 0.0
        %729 = vmatprep.subr.mxu0 0.0
        %730 = vmatpush1.xpose.msra.mxu0 0.0
        %731 = vmatprep.subr.mxu0 0.0
        %732 = vmatpush1.xpose.msra.mxu0 0.0
        %733 = vmatprep.subr.mxu0 0.0
        %734 = vmatpush1.xpose.msra.mxu0 0.0
        %735 = vmatprep.subr.mxu0 0.0
        %736 = vmatpush1.xpose.msra.mxu0 0.0
        %737 = vmatprep.subr.mxu0 0.0
        %738 = vmatpush1.xpose.msra.mxu0 0.0
        %739 = vmatprep.subr.mxu0 0.0
        %740 = vmatpush1.xpose.msra.mxu0 0.0
        %741 = vmatprep.subr.mxu0 0.0
        %742 = vmatpush1.xpose.msra.mxu0 0.0
        %743 = vmatprep.subr.mxu0 0.0
        %744 = vmatpush1.xpose.msra.mxu0 0.0
        %745 = vmatprep.subr.mxu0 0.0
        %746 = vmatpush1.xpose.msra.mxu0 0.0
        %747 = vmatprep.subr.mxu0 0.0
        %748 = vmatpush1.xpose.msra.mxu0 0.0
        %749 = vmatprep.subr.mxu0 0.0
        %750 = vmatpush1.xpose.msra.mxu0 0.0
        %751 = vmatprep.subr.mxu0 0.0
        %752 = vmatpush1.xpose.msra.mxu0 0.0
        %753 = vmatprep.subr.mxu0 0.0
        %754 = vmatpush1.xpose.msra.mxu0 0.0
        %755 = vmatprep.subr.mxu0 0.0
        %756 = vmatpush1.xpose.msra.mxu0 0.0
        %757 = vmatprep.subr.mxu0 0.0
        %758 = vmatpush1.xpose.msra.mxu0 0.0
        %759 = vmatprep.subr.mxu0 0.0
        %760 = vmatpush1.xpose.msra.mxu0 0.0
        %761 = vmatprep.subr.mxu0 0.0
        %762 = vmatpush1.xpose.msra.mxu0 0.0
        %763 = vmatprep.subr.mxu0 0.0
        %764 = vmatpush1.xpose.msra.mxu0 0.0
        %765 = vmatprep.subr.mxu0 0.0
        %766 = vmatpush1.xpose.msra.mxu0 0.0
        %767 = vmatprep.subr.mxu0 0.0
        %768 = vmatpush1.xpose.msra.mxu0 0.0
        %769 = vmatprep.subr.mxu0 0.0
        %770 = vmatpush1.xpose.msra.mxu0 0.0
        %771 = vmatprep.subr.mxu0 0.0
        %772 = vmatpush1.xpose.msra.mxu0 0.0
        %773 = vmatprep.subr.mxu0 0.0
        %774 = vmatpush1.xpose.msra.mxu0 0.0
        %775 = vmatprep.subr.mxu0 0.0
        %776 = vmatpush1.xpose.msra.mxu0 0.0
        %777 = vmatprep.mubr.f32.mxu0 0.0
        %778 = vmatmul.mubr.f32.gmra.mrb[0].mxu0 %v274
        %v779 = vpop.f32.mrb[0].mxu0
        %v780 = vadd.f32 %v291, %v779
        %v781 = vpop.f32.mrb[0].mxu0
        %782 = vdwg.mxu0
        %783 = vmatprep.subr.mxu0 0.0
        %784 = vmatpush1.xpose.msra.mxu0 %v224
        %785 = vmatprep.subr.mxu0 0.0
        %786 = vmatpush1.xpose.msra.mxu0 %v225
        %787 = vmatprep.subr.mxu0 0.0
        %788 = vmatpush1.xpose.msra.mxu0 0.0
        %789 = vmatprep.subr.mxu0 0.0
        %790 = vmatpush1.xpose.msra.mxu0 0.0
        %791 = vmatprep.subr.mxu0 0.0
        %792 = vmatpush1.xpose.msra.mxu0 0.0
        %793 = vmatprep.subr.mxu0 0.0
        %794 = vmatpush1.xpose.msra.mxu0 0.0
        %795 = vmatprep.subr.mxu0 0.0
        %796 = vmatpush1.xpose.msra.mxu0 0.0
        %797 = vmatprep.subr.mxu0 0.0
        %798 = vmatpush1.xpose.msra.mxu0 0.0
        %799 = vmatprep.subr.mxu0 0.0
        %800 = vmatpush1.xpose.msra.mxu0 0.0
        %801 = vmatprep.subr.mxu0 0.0
        %802 = vmatpush1.xpose.msra.mxu0 0.0
        %803 = vmatprep.subr.mxu0 0.0
        %804 = vmatpush1.xpose.msra.mxu0 0.0
        %805 = vmatprep.subr.mxu0 0.0
        %806 = vmatpush1.xpose.msra.mxu0 0.0
        %807 = vmatprep.subr.mxu0 0.0
        %808 = vmatpush1.xpose.msra.mxu0 0.0
        %809 = vmatprep.subr.mxu0 0.0
        %810 = vmatpush1.xpose.msra.mxu0 0.0
        %811 = vmatprep.subr.mxu0 0.0
        %812 = vmatpush1.xpose.msra.mxu0 0.0
        %813 = vmatprep.subr.mxu0 0.0
        %814 = vmatpush1.xpose.msra.mxu0 0.0
        %815 = vmatprep.subr.mxu0 0.0
        %816 = vmatpush1.xpose.msra.mxu0 0.0
        %817 = vmatprep.subr.mxu0 0.0
        %818 = vmatpush1.xpose.msra.mxu0 0.0
        %819 = vmatprep.subr.mxu0 0.0
        %820 = vmatpush1.xpose.msra.mxu0 0.0
        %821 = vmatprep.subr.mxu0 0.0
        %822 = vmatpush1.xpose.msra.mxu0 0.0
        %823 = vmatprep.subr.mxu0 0.0
        %824 = vmatpush1.xpose.msra.mxu0 0.0
        %825 = vmatprep.subr.mxu0 0.0
        %826 = vmatpush1.xpose.msra.mxu0 0.0
        %827 = vmatprep.subr.mxu0 0.0
        %828 = vmatpush1.xpose.msra.mxu0 0.0
        %829 = vmatprep.subr.mxu0 0.0
        %830 = vmatpush1.xpose.msra.mxu0 0.0
        %831 = vmatprep.subr.mxu0 0.0
        %832 = vmatpush1.xpose.msra.mxu0 0.0
        %833 = vmatprep.subr.mxu0 0.0
        %834 = vmatpush1.xpose.msra.mxu0 0.0
        %835 = vmatprep.subr.mxu0 0.0
        %836 = vmatpush1.xpose.msra.mxu0 0.0
        %837 = vmatprep.subr.mxu0 0.0
        %838 = vmatpush1.xpose.msra.mxu0 0.0
        %839 = vmatprep.subr.mxu0 0.0
        %840 = vmatpush1.xpose.msra.mxu0 0.0
        %841 = vmatprep.subr.mxu0 0.0
        %842 = vmatpush1.xpose.msra.mxu0 0.0
        %843 = vmatprep.subr.mxu0 0.0
        %844 = vmatpush1.xpose.msra.mxu0 0.0
        %845 = vmatprep.subr.mxu0 0.0
        %846 = vmatpush1.xpose.msra.mxu0 0.0
        %847 = vmatprep.mubr.f32.mxu0 0.0
        %848 = vmatmul.mubr.f32.gmra.mrb[0].mxu0 %v276
        %v849 = vpop.f32.mrb[0].mxu0
        %v850 = vadd.f32 %v292, %v849
        %v851 = vpop.f32.mrb[0].mxu0
        %852 = vdwg.mxu0
        %vm853 = vcmask 90112
        %v854 = vsel %vm853, %v360, -inf
        %855 = vmax.xlane.f32.xlu0 %v854
        %v856 = vpop.xlane.xlu0 %855
        %v857 = vsel %vm853, %v430, -inf
        %858 = vmax.xlane.f32.xlu0 %v857
        %v859 = vpop.xlane.xlu0 %858
        %v860 = vsel %vm853, %v500, -inf
        %861 = vmax.xlane.f32.xlu0 %v860
        %v862 = vpop.xlane.xlu0 %861
        %v863 = vsel %vm853, %v570, -inf
        %864 = vmax.xlane.f32.xlu0 %v863
        %v865 = vpop.xlane.xlu0 %864
        %v866 = vsel %vm853, %v640, -inf
        %867 = vmax.xlane.f32.xlu0 %v866
        %v868 = vpop.xlane.xlu0 %867
        %v869 = vsel %vm853, %v710, -inf
        %870 = vmax.xlane.f32.xlu0 %v869
        %v871 = vpop.xlane.xlu0 %870
        %v872 = vsel %vm853, %v780, -inf
        %873 = vmax.xlane.f32.xlu0 %v872
        %v874 = vpop.xlane.xlu0 %873
        %v875 = vsel %vm853, %v850, -inf
        %876 = vmax.xlane.f32.xlu0 %v875
        %v877 = vpop.xlane.xlu0 %876
        %v878 = vsub.f32 %v360, %v856
        %v879 = vsub.f32 %v430, %v859
        %v880 = vsub.f32 %v500, %v862
        %v881 = vsub.f32 %v570, %v865
        %v882 = vsub.f32 %v640, %v868
        %v883 = vsub.f32 %v710, %v871
        %v884 = vsub.f32 %v780, %v874
        %v885 = vsub.f32 %v850, %v877
        %v886 = vmul.f32 %v878, 1.442695
        %v887 = vpow.pop %v886
        %v888 = vmul.f32 %v879, 1.442695
        %v889 = vpow.pop %v888
        %v890 = vmul.f32 %v880, 1.442695
        %v891 = vpow.pop %v890
        %v892 = vmul.f32 %v881, 1.442695
        %v893 = vpow.pop %v892
        %v894 = vmul.f32 %v882, 1.442695
        %v895 = vpow.pop %v894
        %v896 = vmul.f32 %v883, 1.442695
        %v897 = vpow.pop %v896
        %v898 = vmul.f32 %v884, 1.442695
        %v899 = vpow.pop %v898
        %v900 = vmul.f32 %v885, 1.442695
        %v901 = vpow.pop %v900
        %v902 = vsel %vm853, %v887, 0.0
        %903 = vadd.xlane.f32.xlu0 %v902
        %v904 = vpop.xlane.xlu0 %903
        %v905 = vsel %vm853, %v889, 0.0
        %906 = vadd.xlane.f32.xlu0 %v905
        %v907 = vpop.xlane.xlu0 %906
        %v908 = vsel %vm853, %v891, 0.0
        %909 = vadd.xlane.f32.xlu0 %v908
        %v910 = vpop.xlane.xlu0 %909
        %v911 = vsel %vm853, %v893, 0.0
        %912 = vadd.xlane.f32.xlu0 %v911
        %v913 = vpop.xlane.xlu0 %912
        %v914 = vsel %vm853, %v895, 0.0
        %915 = vadd.xlane.f32.xlu0 %v914
        %v916 = vpop.xlane.xlu0 %915
        %v917 = vsel %vm853, %v897, 0.0
        %918 = vadd.xlane.f32.xlu0 %v917
        %v919 = vpop.xlane.xlu0 %918
        %v920 = vsel %vm853, %v899, 0.0
        %921 = vadd.xlane.f32.xlu0 %v920
        %v922 = vpop.xlane.xlu0 %921
        %v923 = vsel %vm853, %v901, 0.0
        %924 = vadd.xlane.f32.xlu0 %v923
        %v925 = vpop.xlane.xlu0 %924
        %vm926 = vcmask 97280
        %v928 = vsel %vm926, %v887, 0
        %vm930 = vcmask 1043456
        %v932 = vsel %vm930, %v211, 0
        %934 = vmatprep.subr.mxu0 0.0
        %935 = vmatpush1.msra.mxu0 %v210
        %936 = vmatprep.subr.mxu0 0.0
        %937 = vmatpush1.msra.mxu0 %v932
        %938 = vmatprep.subr.mxu0 0.0
        %939 = vmatpush1.msra.mxu0 0.0
        %940 = vmatprep.subr.mxu0 0.0
        %941 = vmatpush1.msra.mxu0 0.0
        %942 = vmatprep.subr.mxu0 0.0
        %943 = vmatpush1.msra.mxu0 0.0
        %944 = vmatprep.subr.mxu0 0.0
        %945 = vmatpush1.msra.mxu0 0.0
        %946 = vmatprep.subr.mxu0 0.0
        %947 = vmatpush1.msra.mxu0 0.0
        %948 = vmatprep.subr.mxu0 0.0
        %949 = vmatpush1.msra.mxu0 0.0
        %950 = vmatprep.subr.mxu0 0.0
        %951 = vmatpush1.msra.mxu0 0.0
        %952 = vmatprep.subr.mxu0 0.0
        %953 = vmatpush1.msra.mxu0 0.0
        %954 = vmatprep.subr.mxu0 0.0
        %955 = vmatpush1.msra.mxu0 0.0
        %956 = vmatprep.subr.mxu0 0.0
        %957 = vmatpush1.msra.mxu0 0.0
        %958 = vmatprep.subr.mxu0 0.0
        %959 = vmatpush1.msra.mxu0 0.0
        %960 = vmatprep.subr.mxu0 0.0
        %961 = vmatpush1.msra.mxu0 0.0
        %962 = vmatprep.subr.mxu0 0.0
        %963 = vmatpush1.msra.mxu0 0.0
        %964 = vmatprep.subr.mxu0 0.0
        %965 = vmatpush1.msra.mxu0 0.0
        %966 = vmatprep.subr.mxu0 0.0
        %967 = vmatpush1.msra.mxu0 0.0
        %968 = vmatprep.subr.mxu0 0.0
        %969 = vmatpush1.msra.mxu0 0.0
        %970 = vmatprep.subr.mxu0 0.0
        %971 = vmatpush1.msra.mxu0 0.0
        %972 = vmatprep.subr.mxu0 0.0
        %973 = vmatpush1.msra.mxu0 0.0
        %974 = vmatprep.subr.mxu0 0.0
        %975 = vmatpush1.msra.mxu0 0.0
        %976 = vmatprep.subr.mxu0 0.0
        %977 = vmatpush1.msra.mxu0 0.0
        %978 = vmatprep.subr.mxu0 0.0
        %979 = vmatpush1.msra.mxu0 0.0
        %980 = vmatprep.subr.mxu0 0.0
        %981 = vmatpush1.msra.mxu0 0.0
        %982 = vmatprep.subr.mxu0 0.0
        %983 = vmatpush1.msra.mxu0 0.0
        %984 = vmatprep.subr.mxu0 0.0
        %985 = vmatpush1.msra.mxu0 0.0
        %986 = vmatprep.subr.mxu0 0.0
        %987 = vmatpush1.msra.mxu0 0.0
        %988 = vmatprep.subr.mxu0 0.0
        %989 = vmatpush1.msra.mxu0 0.0
        %990 = vmatprep.subr.mxu0 0.0
        %991 = vmatpush1.msra.mxu0 0.0
        %992 = vmatprep.subr.mxu0 0.0
        %993 = vmatpush1.msra.mxu0 0.0
        %994 = vmatprep.subr.mxu0 0.0
        %995 = vmatpush1.msra.mxu0 0.0
        %996 = vmatprep.subr.mxu0 0.0
        %997 = vmatpush1.msra.mxu0 0.0
        %998 = vmatprep.mubr.f32.mxu0 0.0
        %999 = vmatmul.mubr.f32.gmra.mrb[0].mxu0 %v928
        %v1000 = vpop.f32.mrb[0].mxu0
        %v1001 = vadd.f32 0.0, %v1000
        %v1002 = vpop.f32.mrb[0].mxu0
        %1003 = vdwg.mxu0
        %v1005 = vsel %vm926, %v889, 0
        %v1008 = vsel %vm930, %v213, 0
        %1010 = vmatprep.subr.mxu0 0.0
        %1011 = vmatpush1.msra.mxu0 %v212
        %1012 = vmatprep.subr.mxu0 0.0
        %1013 = vmatpush1.msra.mxu0 %v1008
        %1014 = vmatprep.subr.mxu0 0.0
        %1015 = vmatpush1.msra.mxu0 0.0
        %1016 = vmatprep.subr.mxu0 0.0
        %1017 = vmatpush1.msra.mxu0 0.0
        %1018 = vmatprep.subr.mxu0 0.0
        %1019 = vmatpush1.msra.mxu0 0.0
        %1020 = vmatprep.subr.mxu0 0.0
        %1021 = vmatpush1.msra.mxu0 0.0
        %1022 = vmatprep.subr.mxu0 0.0
        %1023 = vmatpush1.msra.mxu0 0.0
        %1024 = vmatprep.subr.mxu0 0.0
        %1025 = vmatpush1.msra.mxu0 0.0
        %1026 = vmatprep.subr.mxu0 0.0
        %1027 = vmatpush1.msra.mxu0 0.0
        %1028 = vmatprep.subr.mxu0 0.0
        %1029 = vmatpush1.msra.mxu0 0.0
        %1030 = vmatprep.subr.mxu0 0.0
        %1031 = vmatpush1.msra.mxu0 0.0
        %1032 = vmatprep.subr.mxu0 0.0
        %1033 = vmatpush1.msra.mxu0 0.0
        %1034 = vmatprep.subr.mxu0 0.0
        %1035 = vmatpush1.msra.mxu0 0.0
        %1036 = vmatprep.subr.mxu0 0.0
        %1037 = vmatpush1.msra.mxu0 0.0
        %1038 = vmatprep.subr.mxu0 0.0
        %1039 = vmatpush1.msra.mxu0 0.0
        %1040 = vmatprep.subr.mxu0 0.0
        %1041 = vmatpush1.msra.mxu0 0.0
        %1042 = vmatprep.subr.mxu0 0.0
        %1043 = vmatpush1.msra.mxu0 0.0
        %1044 = vmatprep.subr.mxu0 0.0
        %1045 = vmatpush1.msra.mxu0 0.0
        %1046 = vmatprep.subr.mxu0 0.0
        %1047 = vmatpush1.msra.mxu0 0.0
        %1048 = vmatprep.subr.mxu0 0.0
        %1049 = vmatpush1.msra.mxu0 0.0
        %1050 = vmatprep.subr.mxu0 0.0
        %1051 = vmatpush1.msra.mxu0 0.0
        %1052 = vmatprep.subr.mxu0 0.0
        %1053 = vmatpush1.msra.mxu0 0.0
        %1054 = vmatprep.subr.mxu0 0.0
        %1055 = vmatpush1.msra.mxu0 0.0
        %1056 = vmatprep.subr.mxu0 0.0
        %1057 = vmatpush1.msra.mxu0 0.0
        %1058 = vmatprep.subr.mxu0 0.0
        %1059 = vmatpush1.msra.mxu0 0.0
        %1060 = vmatprep.subr.mxu0 0.0
        %1061 = vmatpush1.msra.mxu0 0.0
        %1062 = vmatprep.subr.mxu0 0.0
        %1063 = vmatpush1.msra.mxu0 0.0
        %1064 = vmatprep.subr.mxu0 0.0
        %1065 = vmatpush1.msra.mxu0 0.0
        %1066 = vmatprep.subr.mxu0 0.0
        %1067 = vmatpush1.msra.mxu0 0.0
        %1068 = vmatprep.subr.mxu0 0.0
        %1069 = vmatpush1.msra.mxu0 0.0
        %1070 = vmatprep.subr.mxu0 0.0
        %1071 = vmatpush1.msra.mxu0 0.0
        %1072 = vmatprep.subr.mxu0 0.0
        %1073 = vmatpush1.msra.mxu0 0.0
        %1074 = vmatprep.mubr.f32.mxu0 0.0
        %1075 = vmatmul.mubr.f32.gmra.mrb[0].mxu0 %v1005
        %v1076 = vpop.f32.mrb[0].mxu0
        %v1077 = vadd.f32 0.0, %v1076
        %v1078 = vpop.f32.mrb[0].mxu0
        %1079 = vdwg.mxu0
        %v1081 = vsel %vm926, %v891, 0
        %v1084 = vsel %vm930, %v215, 0
        %1086 = vmatprep.subr.mxu0 0.0
        %1087 = vmatpush1.msra.mxu0 %v214
        %1088 = vmatprep.subr.mxu0 0.0
        %1089 = vmatpush1.msra.mxu0 %v1084
        %1090 = vmatprep.subr.mxu0 0.0
        %1091 = vmatpush1.msra.mxu0 0.0
        %1092 = vmatprep.subr.mxu0 0.0
        %1093 = vmatpush1.msra.mxu0 0.0
        %1094 = vmatprep.subr.mxu0 0.0
        %1095 = vmatpush1.msra.mxu0 0.0
        %1096 = vmatprep.subr.mxu0 0.0
        %1097 = vmatpush1.msra.mxu0 0.0
        %1098 = vmatprep.subr.mxu0 0.0
        %1099 = vmatpush1.msra.mxu0 0.0
        %1100 = vmatprep.subr.mxu0 0.0
        %1101 = vmatpush1.msra.mxu0 0.0
        %1102 = vmatprep.subr.mxu0 0.0
        %1103 = vmatpush1.msra.mxu0 0.0
        %1104 = vmatprep.subr.mxu0 0.0
        %1105 = vmatpush1.msra.mxu0 0.0
        %1106 = vmatprep.subr.mxu0 0.0
        %1107 = vmatpush1.msra.mxu0 0.0
        %1108 = vmatprep.subr.mxu0 0.0
        %1109 = vmatpush1.msra.mxu0 0.0
        %1110 = vmatprep.subr.mxu0 0.0
        %1111 = vmatpush1.msra.mxu0 0.0
        %1112 = vmatprep.subr.mxu0 0.0
        %1113 = vmatpush1.msra.mxu0 0.0
        %1114 = vmatprep.subr.mxu0 0.0
        %1115 = vmatpush1.msra.mxu0 0.0
        %1116 = vmatprep.subr.mxu0 0.0
        %1117 = vmatpush1.msra.mxu0 0.0
        %1118 = vmatprep.subr.mxu0 0.0
        %1119 = vmatpush1.msra.mxu0 0.0
        %1120 = vmatprep.subr.mxu0 0.0
        %1121 = vmatpush1.msra.mxu0 0.0
        %1122 = vmatprep.subr.mxu0 0.0
        %1123 = vmatpush1.msra.mxu0 0.0
        %1124 = vmatprep.subr.mxu0 0.0
        %1125 = vmatpush1.msra.mxu0 0.0
        %1126 = vmatprep.subr.mxu0 0.0
        %1127 = vmatpush1.msra.mxu0 0.0
        %1128 = vmatprep.subr.mxu0 0.0
        %1129 = vmatpush1.msra.mxu0 0.0
        %1130 = vmatprep.subr.mxu0 0.0
        %1131 = vmatpush1.msra.mxu0 0.0
        %1132 = vmatprep.subr.mxu0 0.0
        %1133 = vmatpush1.msra.mxu0 0.0
        %1134 = vmatprep.subr.mxu0 0.0
        %1135 = vmatpush1.msra.mxu0 0.0
        %1136 = vmatprep.subr.mxu0 0.0
        %1137 = vmatpush1.msra.mxu0 0.0
        %1138 = vmatprep.subr.mxu0 0.0
        %1139 = vmatpush1.msra.mxu0 0.0
        %1140 = vmatprep.subr.mxu0 0.0
        %1141 = vmatpush1.msra.mxu0 0.0
        %1142 = vmatprep.subr.mxu0 0.0
        %1143 = vmatpush1.msra.mxu0 0.0
        %1144 = vmatprep.subr.mxu0 0.0
        %1145 = vmatpush1.msra.mxu0 0.0
        %1146 = vmatprep.subr.mxu0 0.0
        %1147 = vmatpush1.msra.mxu0 0.0
        %1148 = vmatprep.subr.mxu0 0.0
        %1149 = vmatpush1.msra.mxu0 0.0
        %1150 = vmatprep.mubr.f32.mxu0 0.0
        %1151 = vmatmul.mubr.f32.gmra.mrb[0].mxu0 %v1081
        %v1152 = vpop.f32.mrb[0].mxu0
        %v1153 = vadd.f32 0.0, %v1152
        %v1154 = vpop.f32.mrb[0].mxu0
        %1155 = vdwg.mxu0
        %v1157 = vsel %vm926, %v893, 0
        %v1160 = vsel %vm930, %v217, 0
        %1162 = vmatprep.subr.mxu0 0.0
        %1163 = vmatpush1.msra.mxu0 %v216
        %1164 = vmatprep.subr.mxu0 0.0
        %1165 = vmatpush1.msra.mxu0 %v1160
        %1166 = vmatprep.subr.mxu0 0.0
        %1167 = vmatpush1.msra.mxu0 0.0
        %1168 = vmatprep.subr.mxu0 0.0
        %1169 = vmatpush1.msra.mxu0 0.0
        %1170 = vmatprep.subr.mxu0 0.0
        %1171 = vmatpush1.msra.mxu0 0.0
        %1172 = vmatprep.subr.mxu0 0.0
        %1173 = vmatpush1.msra.mxu0 0.0
        %1174 = vmatprep.subr.mxu0 0.0
        %1175 = vmatpush1.msra.mxu0 0.0
        %1176 = vmatprep.subr.mxu0 0.0
        %1177 = vmatpush1.msra.mxu0 0.0
        %1178 = vmatprep.subr.mxu0 0.0
        %1179 = vmatpush1.msra.mxu0 0.0
        %1180 = vmatprep.subr.mxu0 0.0
        %1181 = vmatpush1.msra.mxu0 0.0
        %1182 = vmatprep.subr.mxu0 0.0
        %1183 = vmatpush1.msra.mxu0 0.0
        %1184 = vmatprep.subr.mxu0 0.0
        %1185 = vmatpush1.msra.mxu0 0.0
        %1186 = vmatprep.subr.mxu0 0.0
        %1187 = vmatpush1.msra.mxu0 0.0
        %1188 = vmatprep.subr.mxu0 0.0
        %1189 = vmatpush1.msra.mxu0 0.0
        %1190 = vmatprep.subr.mxu0 0.0
        %1191 = vmatpush1.msra.mxu0 0.0
        %1192 = vmatprep.subr.mxu0 0.0
        %1193 = vmatpush1.msra.mxu0 0.0
        %1194 = vmatprep.subr.mxu0 0.0
        %1195 = vmatpush1.msra.mxu0 0.0
        %1196 = vmatprep.subr.mxu0 0.0
        %1197 = vmatpush1.msra.mxu0 0.0
        %1198 = vmatprep.subr.mxu0 0.0
        %1199 = vmatpush1.msra.mxu0 0.0
        %1200 = vmatprep.subr.mxu0 0.0
        %1201 = vmatpush1.msra.mxu0 0.0
        %1202 = vmatprep.subr.mxu0 0.0
        %1203 = vmatpush1.msra.mxu0 0.0
        %1204 = vmatprep.subr.mxu0 0.0
        %1205 = vmatpush1.msra.mxu0 0.0
        %1206 = vmatprep.subr.mxu0 0.0
        %1207 = vmatpush1.msra.mxu0 0.0
        %1208 = vmatprep.subr.mxu0 0.0
        %1209 = vmatpush1.msra.mxu0 0.0
        %1210 = vmatprep.subr.mxu0 0.0
        %1211 = vmatpush1.msra.mxu0 0.0
        %1212 = vmatprep.subr.mxu0 0.0
        %1213 = vmatpush1.msra.mxu0 0.0
        %1214 = vmatprep.subr.mxu0 0.0
        %1215 = vmatpush1.msra.mxu0 0.0
        %1216 = vmatprep.subr.mxu0 0.0
        %1217 = vmatpush1.msra.mxu0 0.0
        %1218 = vmatprep.subr.mxu0 0.0
        %1219 = vmatpush1.msra.mxu0 0.0
        %1220 = vmatprep.subr.mxu0 0.0
        %1221 = vmatpush1.msra.mxu0 0.0
        %1222 = vmatprep.subr.mxu0 0.0
        %1223 = vmatpush1.msra.mxu0 0.0
        %1224 = vmatprep.subr.mxu0 0.0
        %1225 = vmatpush1.msra.mxu0 0.0
        %1226 = vmatprep.mubr.f32.mxu0 0.0
        %1227 = vmatmul.mubr.f32.gmra.mrb[0].mxu0 %v1157
        %v1228 = vpop.f32.mrb[0].mxu0
        %v1229 = vadd.f32 0.0, %v1228
        %v1230 = vpop.f32.mrb[0].mxu0
        %1231 = vdwg.mxu0
        %v1233 = vsel %vm926, %v895, 0
        %v1236 = vsel %vm930, %v219, 0
        %1238 = vmatprep.subr.mxu0 0.0
        %1239 = vmatpush1.msra.mxu0 %v218
        %1240 = vmatprep.subr.mxu0 0.0
        %1241 = vmatpush1.msra.mxu0 %v1236
        %1242 = vmatprep.subr.mxu0 0.0
        %1243 = vmatpush1.msra.mxu0 0.0
        %1244 = vmatprep.subr.mxu0 0.0
        %1245 = vmatpush1.msra.mxu0 0.0
        %1246 = vmatprep.subr.mxu0 0.0
        %1247 = vmatpush1.msra.mxu0 0.0
        %1248 = vmatprep.subr.mxu0 0.0
        %1249 = vmatpush1.msra.mxu0 0.0
        %1250 = vmatprep.subr.mxu0 0.0
        %1251 = vmatpush1.msra.mxu0 0.0
        %1252 = vmatprep.subr.mxu0 0.0
        %1253 = vmatpush1.msra.mxu0 0.0
        %1254 = vmatprep.subr.mxu0 0.0
        %1255 = vmatpush1.msra.mxu0 0.0
        %1256 = vmatprep.subr.mxu0 0.0
        %1257 = vmatpush1.msra.mxu0 0.0
        %1258 = vmatprep.subr.mxu0 0.0
        %1259 = vmatpush1.msra.mxu0 0.0
        %1260 = vmatprep.subr.mxu0 0.0
        %1261 = vmatpush1.msra.mxu0 0.0
        %1262 = vmatprep.subr.mxu0 0.0
        %1263 = vmatpush1.msra.mxu0 0.0
        %1264 = vmatprep.subr.mxu0 0.0
        %1265 = vmatpush1.msra.mxu0 0.0
        %1266 = vmatprep.subr.mxu0 0.0
        %1267 = vmatpush1.msra.mxu0 0.0
        %1268 = vmatprep.subr.mxu0 0.0
        %1269 = vmatpush1.msra.mxu0 0.0
        %1270 = vmatprep.subr.mxu0 0.0
        %1271 = vmatpush1.msra.mxu0 0.0
        %1272 = vmatprep.subr.mxu0 0.0
        %1273 = vmatpush1.msra.mxu0 0.0
        %1274 = vmatprep.subr.mxu0 0.0
        %1275 = vmatpush1.msra.mxu0 0.0
        %1276 = vmatprep.subr.mxu0 0.0
        %1277 = vmatpush1.msra.mxu0 0.0
        %1278 = vmatprep.subr.mxu0 0.0
        %1279 = vmatpush1.msra.mxu0 0.0
        %1280 = vmatprep.subr.mxu0 0.0
        %1281 = vmatpush1.msra.mxu0 0.0
        %1282 = vmatprep.subr.mxu0 0.0
        %1283 = vmatpush1.msra.mxu0 0.0
        %1284 = vmatprep.subr.mxu0 0.0
        %1285 = vmatpush1.msra.mxu0 0.0
        %1286 = vmatprep.subr.mxu0 0.0
        %1287 = vmatpush1.msra.mxu0 0.0
        %1288 = vmatprep.subr.mxu0 0.0
        %1289 = vmatpush1.msra.mxu0 0.0
        %1290 = vmatprep.subr.mxu0 0.0
        %1291 = vmatpush1.msra.mxu0 0.0
        %1292 = vmatprep.subr.mxu0 0.0
        %1293 = vmatpush1.msra.mxu0 0.0
        %1294 = vmatprep.subr.mxu0 0.0
        %1295 = vmatpush1.msra.mxu0 0.0
        %1296 = vmatprep.subr.mxu0 0.0
        %1297 = vmatpush1.msra.mxu0 0.0
        %1298 = vmatprep.subr.mxu0 0.0
        %1299 = vmatpush1.msra.mxu0 0.0
        %1300 = vmatprep.subr.mxu0 0.0
        %1301 = vmatpush1.msra.mxu0 0.0
        %1302 = vmatprep.mubr.f32.mxu0 0.0
        %1303 = vmatmul.mubr.f32.gmra.mrb[0].mxu0 %v1233
        %v1304 = vpop.f32.mrb[0].mxu0
        %v1305 = vadd.f32 0.0, %v1304
        %v1306 = vpop.f32.mrb[0].mxu0
        %1307 = vdwg.mxu0
        %v1309 = vsel %vm926, %v897, 0
        %v1312 = vsel %vm930, %v221, 0
        %1314 = vmatprep.subr.mxu0 0.0
        %1315 = vmatpush1.msra.mxu0 %v220
        %1316 = vmatprep.subr.mxu0 0.0
        %1317 = vmatpush1.msra.mxu0 %v1312
        %1318 = vmatprep.subr.mxu0 0.0
        %1319 = vmatpush1.msra.mxu0 0.0
        %1320 = vmatprep.subr.mxu0 0.0
        %1321 = vmatpush1.msra.mxu0 0.0
        %1322 = vmatprep.subr.mxu0 0.0
        %1323 = vmatpush1.msra.mxu0 0.0
        %1324 = vmatprep.subr.mxu0 0.0
        %1325 = vmatpush1.msra.mxu0 0.0
        %1326 = vmatprep.subr.mxu0 0.0
        %1327 = vmatpush1.msra.mxu0 0.0
        %1328 = vmatprep.subr.mxu0 0.0
        %1329 = vmatpush1.msra.mxu0 0.0
        %1330 = vmatprep.subr.mxu0 0.0
        %1331 = vmatpush1.msra.mxu0 0.0
        %1332 = vmatprep.subr.mxu0 0.0
        %1333 = vmatpush1.msra.mxu0 0.0
        %1334 = vmatprep.subr.mxu0 0.0
        %1335 = vmatpush1.msra.mxu0 0.0
        %1336 = vmatprep.subr.mxu0 0.0
        %1337 = vmatpush1.msra.mxu0 0.0
        %1338 = vmatprep.subr.mxu0 0.0
        %1339 = vmatpush1.msra.mxu0 0.0
        %1340 = vmatprep.subr.mxu0 0.0
        %1341 = vmatpush1.msra.mxu0 0.0
        %1342 = vmatprep.subr.mxu0 0.0
        %1343 = vmatpush1.msra.mxu0 0.0
        %1344 = vmatprep.subr.mxu0 0.0
        %1345 = vmatpush1.msra.mxu0 0.0
        %1346 = vmatprep.subr.mxu0 0.0
        %1347 = vmatpush1.msra.mxu0 0.0
        %1348 = vmatprep.subr.mxu0 0.0
        %1349 = vmatpush1.msra.mxu0 0.0
        %1350 = vmatprep.subr.mxu0 0.0
        %1351 = vmatpush1.msra.mxu0 0.0
        %1352 = vmatprep.subr.mxu0 0.0
        %1353 = vmatpush1.msra.mxu0 0.0
        %1354 = vmatprep.subr.mxu0 0.0
        %1355 = vmatpush1.msra.mxu0 0.0
        %1356 = vmatprep.subr.mxu0 0.0
        %1357 = vmatpush1.msra.mxu0 0.0
        %1358 = vmatprep.subr.mxu0 0.0
        %1359 = vmatpush1.msra.mxu0 0.0
        %1360 = vmatprep.subr.mxu0 0.0
        %1361 = vmatpush1.msra.mxu0 0.0
        %1362 = vmatprep.subr.mxu0 0.0
        %1363 = vmatpush1.msra.mxu0 0.0
        %1364 = vmatprep.subr.mxu0 0.0
        %1365 = vmatpush1.msra.mxu0 0.0
        %1366 = vmatprep.subr.mxu0 0.0
        %1367 = vmatpush1.msra.mxu0 0.0
        %1368 = vmatprep.subr.mxu0 0.0
        %1369 = vmatpush1.msra.mxu0 0.0
        %1370 = vmatprep.subr.mxu0 0.0
        %1371 = vmatpush1.msra.mxu0 0.0
        %1372 = vmatprep.subr.mxu0 0.0
        %1373 = vmatpush1.msra.mxu0 0.0
        %1374 = vmatprep.subr.mxu0 0.0
        %1375 = vmatpush1.msra.mxu0 0.0
        %1376 = vmatprep.subr.mxu0 0.0
        %1377 = vmatpush1.msra.mxu0 0.0
        %1378 = vmatprep.mubr.f32.mxu0 0.0
        %1379 = vmatmul.mubr.f32.gmra.mrb[0].mxu0 %v1309
        %v1380 = vpop.f32.mrb[0].mxu0
        %v1381 = vadd.f32 0.0, %v1380
        %v1382 = vpop.f32.mrb[0].mxu0
        %1383 = vdwg.mxu0
        %v1385 = vsel %vm926, %v899, 0
        %v1388 = vsel %vm930, %v223, 0
        %1390 = vmatprep.subr.mxu0 0.0
        %1391 = vmatpush1.msra.mxu0 %v222
        %1392 = vmatprep.subr.mxu0 0.0
        %1393 = vmatpush1.msra.mxu0 %v1388
        %1394 = vmatprep.subr.mxu0 0.0
        %1395 = vmatpush1.msra.mxu0 0.0
        %1396 = vmatprep.subr.mxu0 0.0
        %1397 = vmatpush1.msra.mxu0 0.0
        %1398 = vmatprep.subr.mxu0 0.0
        %1399 = vmatpush1.msra.mxu0 0.0
        %1400 = vmatprep.subr.mxu0 0.0
        %1401 = vmatpush1.msra.mxu0 0.0
        %1402 = vmatprep.subr.mxu0 0.0
        %1403 = vmatpush1.msra.mxu0 0.0
        %1404 = vmatprep.subr.mxu0 0.0
        %1405 = vmatpush1.msra.mxu0 0.0
        %1406 = vmatprep.subr.mxu0 0.0
        %1407 = vmatpush1.msra.mxu0 0.0
        %1408 = vmatprep.subr.mxu0 0.0
        %1409 = vmatpush1.msra.mxu0 0.0
        %1410 = vmatprep.subr.mxu0 0.0
        %1411 = vmatpush1.msra.mxu0 0.0
        %1412 = vmatprep.subr.mxu0 0.0
        %1413 = vmatpush1.msra.mxu0 0.0
        %1414 = vmatprep.subr.mxu0 0.0
        %1415 = vmatpush1.msra.mxu0 0.0
        %1416 = vmatprep.subr.mxu0 0.0
        %1417 = vmatpush1.msra.mxu0 0.0
        %1418 = vmatprep.subr.mxu0 0.0
        %1419 = vmatpush1.msra.mxu0 0.0
        %1420 = vmatprep.subr.mxu0 0.0
        %1421 = vmatpush1.msra.mxu0 0.0
        %1422 = vmatprep.subr.mxu0 0.0
        %1423 = vmatpush1.msra.mxu0 0.0
        %1424 = vmatprep.subr.mxu0 0.0
        %1425 = vmatpush1.msra.mxu0 0.0
        %1426 = vmatprep.subr.mxu0 0.0
        %1427 = vmatpush1.msra.mxu0 0.0
        %1428 = vmatprep.subr.mxu0 0.0
        %1429 = vmatpush1.msra.mxu0 0.0
        %1430 = vmatprep.subr.mxu0 0.0
        %1431 = vmatpush1.msra.mxu0 0.0
        %1432 = vmatprep.subr.mxu0 0.0
        %1433 = vmatpush1.msra.mxu0 0.0
        %1434 = vmatprep.subr.mxu0 0.0
        %1435 = vmatpush1.msra.mxu0 0.0
        %1436 = vmatprep.subr.mxu0 0.0
        %1437 = vmatpush1.msra.mxu0 0.0
        %1438 = vmatprep.subr.mxu0 0.0
        %1439 = vmatpush1.msra.mxu0 0.0
        %1440 = vmatprep.subr.mxu0 0.0
        %1441 = vmatpush1.msra.mxu0 0.0
        %1442 = vmatprep.subr.mxu0 0.0
        %1443 = vmatpush1.msra.mxu0 0.0
        %1444 = vmatprep.subr.mxu0 0.0
        %1445 = vmatpush1.msra.mxu0 0.0
        %1446 = vmatprep.subr.mxu0 0.0
        %1447 = vmatpush1.msra.mxu0 0.0
        %1448 = vmatprep.subr.mxu0 0.0
        %1449 = vmatpush1.msra.mxu0 0.0
        %1450 = vmatprep.subr.mxu0 0.0
        %1451 = vmatpush1.msra.mxu0 0.0
        %1452 = vmatprep.subr.mxu0 0.0
        %1453 = vmatpush1.msra.mxu0 0.0
        %1454 = vmatprep.mubr.f32.mxu0 0.0
        %1455 = vmatmul.mubr.f32.gmra.mrb[0].mxu0 %v1385
        %v1456 = vpop.f32.mrb[0].mxu0
        %v1457 = vadd.f32 0.0, %v1456
        %v1458 = vpop.f32.mrb[0].mxu0
        %1459 = vdwg.mxu0
        %v1461 = vsel %vm926, %v901, 0
        %v1464 = vsel %vm930, %v225, 0
        %1466 = vmatprep.subr.mxu0 0.0
        %1467 = vmatpush1.msra.mxu0 %v224
        %1468 = vmatprep.subr.mxu0 0.0
        %1469 = vmatpush1.msra.mxu0 %v1464
        %1470 = vmatprep.subr.mxu0 0.0
        %1471 = vmatpush1.msra.mxu0 0.0
        %1472 = vmatprep.subr.mxu0 0.0
        %1473 = vmatpush1.msra.mxu0 0.0
        %1474 = vmatprep.subr.mxu0 0.0
        %1475 = vmatpush1.msra.mxu0 0.0
        %1476 = vmatprep.subr.mxu0 0.0
        %1477 = vmatpush1.msra.mxu0 0.0
        %1478 = vmatprep.subr.mxu0 0.0
        %1479 = vmatpush1.msra.mxu0 0.0
        %1480 = vmatprep.subr.mxu0 0.0
        %1481 = vmatpush1.msra.mxu0 0.0
        %1482 = vmatprep.subr.mxu0 0.0
        %1483 = vmatpush1.msra.mxu0 0.0
        %1484 = vmatprep.subr.mxu0 0.0
        %1485 = vmatpush1.msra.mxu0 0.0
        %1486 = vmatprep.subr.mxu0 0.0
        %1487 = vmatpush1.msra.mxu0 0.0
        %1488 = vmatprep.subr.mxu0 0.0
        %1489 = vmatpush1.msra.mxu0 0.0
        %1490 = vmatprep.subr.mxu0 0.0
        %1491 = vmatpush1.msra.mxu0 0.0
        %1492 = vmatprep.subr.mxu0 0.0
        %1493 = vmatpush1.msra.mxu0 0.0
        %1494 = vmatprep.subr.mxu0 0.0
        %1495 = vmatpush1.msra.mxu0 0.0
        %1496 = vmatprep.subr.mxu0 0.0
        %1497 = vmatpush1.msra.mxu0 0.0
        %1498 = vmatprep.subr.mxu0 0.0
        %1499 = vmatpush1.msra.mxu0 0.0
        %1500 = vmatprep.subr.mxu0 0.0
        %1501 = vmatpush1.msra.mxu0 0.0
        %1502 = vmatprep.subr.mxu0 0.0
        %1503 = vmatpush1.msra.mxu0 0.0
        %1504 = vmatprep.subr.mxu0 0.0
        %1505 = vmatpush1.msra.mxu0 0.0
        %1506 = vmatprep.subr.mxu0 0.0
        %1507 = vmatpush1.msra.mxu0 0.0
        %1508 = vmatprep.subr.mxu0 0.0
        %1509 = vmatpush1.msra.mxu0 0.0
        %1510 = vmatprep.subr.mxu0 0.0
        %1511 = vmatpush1.msra.mxu0 0.0
        %1512 = vmatprep.subr.mxu0 0.0
        %1513 = vmatpush1.msra.mxu0 0.0
        %1514 = vmatprep.subr.mxu0 0.0
        %1515 = vmatpush1.msra.mxu0 0.0
        %1516 = vmatprep.subr.mxu0 0.0
        %1517 = vmatpush1.msra.mxu0 0.0
        %1518 = vmatprep.subr.mxu0 0.0
        %1519 = vmatpush1.msra.mxu0 0.0
        %1520 = vmatprep.subr.mxu0 0.0
        %1521 = vmatpush1.msra.mxu0 0.0
        %1522 = vmatprep.subr.mxu0 0.0
        %1523 = vmatpush1.msra.mxu0 0.0
        %1524 = vmatprep.subr.mxu0 0.0
        %1525 = vmatpush1.msra.mxu0 0.0
        %1526 = vmatprep.subr.mxu0 0.0
        %1527 = vmatpush1.msra.mxu0 0.0
        %1528 = vmatprep.subr.mxu0 0.0
        %1529 = vmatpush1.msra.mxu0 0.0
        %1530 = vmatprep.mubr.f32.mxu0 0.0
        %1531 = vmatmul.mubr.f32.gmra.mrb[0].mxu0 %v1461
        %v1532 = vpop.f32.mrb[0].mxu0
        %v1533 = vadd.f32 0.0, %v1532
        %v1534 = vpop.f32.mrb[0].mxu0
        %1535 = vdwg.mxu0
        %v1536 = vrcp.pop %v904
        %v1537 = vrcp.pop %v907
        %v1538 = vrcp.pop %v910
        %v1539 = vrcp.pop %v913
        %v1540 = vrcp.pop %v916
        %v1541 = vrcp.pop %v919
        %v1542 = vrcp.pop %v922
        %v1543 = vrcp.pop %v925
        %v1544 = vmul.f32 %v1001, %v1536
        %v1545 = vmul.f32 %v1077, %v1537
        %v1546 = vmul.f32 %v1153, %v1538
        %v1547 = vmul.f32 %v1229, %v1539
        %v1548 = vmul.f32 %v1305, %v1540
        %v1549 = vmul.f32 %v1381, %v1541
        %v1550 = vmul.f32 %v1457, %v1542
        %v1551 = vmul.f32 %v1533, %v1543
        %v1560 = vrot.slane %v1545, 7
        %vm1561 = vcmask 1041409
        %v1562 = vsel %vm1561, %v1560, %v1544
        %v1563 = vrot.slane %v1546, 6
        %vm1564 = vcmask 1042434
        %v1565 = vsel %vm1564, %v1563, %v1562
        %v1566 = vrot.slane %v1547, 5
        %vm1567 = vcmask 1043459
        %v1568 = vsel %vm1567, %v1566, %v1565
        %v1569 = vrot.slane %v1548, 4
        %vm1570 = vcmask 1044484
        %v1571 = vsel %vm1570, %v1569, %v1568
        %v1572 = vrot.slane %v1549, 3
        %vm1573 = vcmask 1045509
        %v1574 = vsel %vm1573, %v1572, %v1571
        %v1575 = vrot.slane %v1550, 2
        %vm1576 = vcmask 1046534
        %v1577 = vsel %vm1576, %v1575, %v1574
        %v1578 = vrot.slane %v1551, 1
        %vm1579 = vcmask 1047559
        %v1580 = vsel %vm1579, %v1578, %v1577
        %1582 = vst [vmem:[%s193] sm:$0xff] %v1580
        %s1583 = sand.u32 %s103, 1
        %s1584 = scalar_lea.sflag [#allocation3], %s1583
        %s1585 = sand.u32 %s103, 1
        %s1586 = smul.addr %s1585, 8
        %s1587 = scalar_lea.vmem [#allocation2], %s1586
        // Predicated region
        $region33: #{_lambda_.1} parent=31 // pred_check
          %p1588 = pneg %p113
        $region34: #{_lambda_.1} parent=31 // pred_check_branch
          %1590 = sbr.rel (%p1588) target = $region36
        $region35: #{_lambda_.1} parent=31 // pred_region
          %s1592 = ssub.s32 128, 128
          %1593 = vsyncadd %s1584, %s1592
          %s1594 = smul.addr %s17, 128
          %s1595 = scalar_lea.hbm %s3, %s1594
          %s1597 = sshll.u32 %s1587, 4
          %s1598 = int_to_ptr.vmem [resolvable:$true] %s1597
          %1600 = dma.vmem_to_hbm [thread:$0]  %s1598, 128, %s1595, %s1584
        $region36: #{_lambda_.1} parent=31 // pred_fallthru
          _
      $region32: #{_lambda_.1} parent=5 // pred_fallthru
        _
      %p1601 = scmp.le.s32.totalorder 2, %s12
      // Predicated region
      $region37: #{_lambda_.1} parent=5 // pred_check
        %p1602 = pneg %p1601
      $region38: #{_lambda_.1} parent=5 // pred_check_branch
        %1604 = sbr.rel (%p1602) target = $region40
      $region39: #{_lambda_.1} parent=5 // pred_region
        %s1605 = ssub.s32 %s12, 2
        // Predicated region
        $region41: #{_lambda_.1} parent=39 // pred_check
          %p1606 = pneg %p119
        $region42: #{_lambda_.1} parent=39 // pred_check_branch
          %1608 = sbr.rel (%p1606) target = $region44
        $region43: #{_lambda_.1} parent=39 // pred_region
          %s1609 = sand.u32 %s104, 1
          %s1610 = scalar_lea.sflag [#allocation3], %s1609
          %s1611 = sand.u32 %s104, 1
          %s1612 = smul.addr %s1611, 8
          %s1613 = scalar_lea.vmem [#allocation2], %s1612
          %1614 = dma.done %s1610, 128
        $region44: #{_lambda_.1} parent=39 // pred_fallthru
          _
      $region40: #{_lambda_.1} parent=5 // pred_fallthru
        _
    $region6: #{_lambda_.1} parent=1 // loop_footer
      %s16 = sadd.s32 1, %s12
    $region7: #{_lambda_.1} parent=1 // loop_footer_branch
      %11 = sbr.rel target = $region3
    $region8: #{_lambda_.1} parent=1 // loop_exit
      _
    %1615 = vsyncpa [#allocation3], 1
    %s1616 = scalar_lea.sflag [#allocation3], 1
    %1617 = vsyncpa %s1616, 1

</llo_original>
